<compile_context>
chip_gen: v7x
topology: tpu7x:2x2x1
jax: 0.10.0
libtpu: 0.0.40
codegen_flags: <defaults>
</compile_context>

<pallas_src>
import math

import jax
import jax.numpy as jnp
from jax import lax
from jax.experimental import pallas as pl
from jax.experimental.pallas import tpu as pltpu


# ---------------------- fused MLP + align + Sinkhorn kernel ------------------
def make_fused_kernel(n_lin1, n_lin2, num_labels, embed_dim, activation,
                      n_iters, atol, unroll):
    act = {"relu": lambda v: jnp.maximum(v, 0.0), "tanh": jnp.tanh}[activation]

    def kernel(x1_ref, x2_ref, p1_ref, p2_ref, *rest):
        out_ref = rest[-1]
        param_refs = rest[:-1]
        params1 = param_refs[:2 * n_lin1]
        params2 = param_refs[2 * n_lin1:]

        def mlp(x, ps, n):
            h = x
            for i in range(n):
                w = ps[2 * i][...]          # (in, out)
                b = ps[2 * i + 1][...]      # (1, out)
                h = jnp.dot(h, w, preferred_element_type=jnp.float32) + b
                if i < n - 1:
                    h = act(h)
            return h

        h1 = mlp(x1_ref[...], params1, n_lin1)      # (A, L*E)
        h2 = mlp(x2_ref[...], params2, n_lin2)      # (B, L*E)

        e = embed_dim
        inv_sqrt_e = 1.0 / math.sqrt(e)

        def zscore(q):
            mean = jnp.mean(q, axis=-1, keepdims=True)
            # torch.var default is unbiased (correction=1)
            var = jnp.sum((q - mean) ** 2, axis=-1, keepdims=True) / (e - 1)
            return (q - mean) / jnp.sqrt(var + 1e-8)

        # Per-label exp(scaled dot); labels stacked along the leading axis.
        planes = []
        for l in range(num_labels):
            q1 = zscore(h1[:, l * e:(l + 1) * e])   # (A, E)
            q2 = zscore(h2[:, l * e:(l + 1) * e])   # (B, E)
            s = lax.dot_general(
                q1, q2, dimension_numbers=(((1,), (1,)), ((), ())),
                preferred_element_type=jnp.float32) * inv_sqrt_e
            planes.append(jnp.exp(s)[None])          # (1, A, B)
        m0 = jnp.concatenate(planes, axis=0)          # (L, A, B)

        p1 = p1_ref[...]                              # (L, A, 1) row targets
        p2 = p2_ref[...]                              # (L, 1, B) col targets

        def one_iter(m, done):
            # column normalization (scale folded before the broadcast multiply)
            col = jnp.sum(m, axis=1, keepdims=True)                    # (L,1,B)
            m1 = m * (p2 * pl.reciprocal(col + 1e-8, approx=False))
            row = jnp.sum(m1, axis=2, keepdims=True)                   # (L,A,1)
            err1 = jnp.max(jnp.abs(row - p1), axis=1, keepdims=True)   # (L,1,1)
            ok1 = (err1 <= atol).astype(jnp.float32)
            # row normalization
            m2 = m1 * (p1 * pl.reciprocal(row + 1e-8, approx=False))
            col2 = jnp.sum(m2, axis=1, keepdims=True)                  # (L,1,B)
            err2 = jnp.max(jnp.abs(col2 - p2), axis=2, keepdims=True)  # (L,1,1)
            ok2 = (err2 <= atol).astype(jnp.float32)
            new_m = ok1 * m1 + (1.0 - ok1) * m2
            step_done = jnp.maximum(ok1, ok2)
            # freeze labels that already converged on an earlier iteration
            m_next = done * m + (1.0 - done) * new_m
            return m_next, jnp.maximum(done, step_done)

        def cond(carry):
            _m, done, it = carry
            return jnp.logical_and(it < n_iters, jnp.min(done) < 0.5)

        def body(carry):
            m, done, it = carry
            for _ in range(unroll):   # amortize the scalar (vreg->sreg) readback
                m, done = one_iter(m, done)
            return m, done, it + unroll

        done0 = jnp.zeros((num_labels, 1, 1), jnp.float32)
        m_final, _, _ = lax.while_loop(cond, body, (m0, done0, jnp.int32(0)))
        out_ref[...] = m_final

    return kernel


# ----------------------------- full forward ----------------------------------
def ce_alignment_forward(x1, x2, x1_probs, x2_probs, params1, params2,
                         num_labels, activation, n_iters=500, atol=0.01):
    A = x1.shape[0]
    B = x2.shape[0]
    out_dim = params1[-2].shape[1]
    E = out_dim // num_labels

    # Tiny per-label marginal rearrangements stay on the host (few hundred B).
    p1 = jnp.transpose(x1_probs, (1, 0)).reshape(num_labels, A, 1)   # (L, A, 1)
    p2 = jnp.transpose(x2_probs, (1, 0)).reshape(num_labels, 1, B)   # (L, 1, B)

    # Inner unroll must divide n_iters so the max-iteration cap is exact.
    unroll = next(u for u in (5, 4, 2, 1) if n_iters % u == 0)

    kernel = make_fused_kernel(
        len(params1) // 2, len(params2) // 2, num_labels, E,
        activation, n_iters, atol, unroll)

    normalized = pl.pallas_call(
        kernel,
        out_shape=jax.ShapeDtypeStruct((num_labels, A, B), jnp.float32),
        compiler_params=pltpu.CompilerParams(
            vmem_limit_bytes=32 * 1024 * 1024,
        ),
    )(x1, x2, p1, p2, *params1, *params2)

    return jnp.transpose(normalized, (1, 2, 0))                       # (A, B, L)


# --------------------------- pure-JAX reference ------------------------------
def reference_forward(x1, x2, x1_probs, x2_probs, params1, params2,
                      num_labels, activation, n_iters=500):
    act = {"relu": lambda v: jnp.maximum(v, 0.0), "tanh": jnp.tanh}[activation]

    def mlp_apply(x, params):
        h = x
        n = len(params) // 2
        for i in range(n):
            h = h @ params[2 * i] + params[2 * i + 1]
            if i < n - 1:
                h = act(h)
        return h

    A, B = x1.shape[0], x2.shape[0]
    q1 = mlp_apply(x1, params1).reshape(A, num_labels, -1)
    q2 = mlp_apply(x2, params2).reshape(B, num_labels, -1)
    E = q1.shape[-1]

    def zscore(q):
        mean = jnp.mean(q, axis=2, keepdims=True)
        var = jnp.sum((q - mean) ** 2, axis=2, keepdims=True) / (E - 1)
        return (q - mean) / jnp.sqrt(var + 1e-8)

    q1 = zscore(q1)
    q2 = zscore(q2)
    align = jnp.exp(jnp.einsum("ahx,bhx->abh", q1, q2) / math.sqrt(E))

    outs = []
    for i in range(num_labels):
        m0 = align[..., i]
        p1 = x1_probs[:, i][:, None]
        p2 = x2_probs[:, i][None, :]

        def body(j, carry, p1=p1, p2=p2):
            m, done = carry
            col = jnp.sum(m, axis=0, keepdims=True)
            m1 = m / (col + 1e-8) * p2
            row = jnp.sum(m1, axis=1, keepdims=True)
            ok1 = jnp.max(jnp.abs(row - p1)) <= 0.01
            m2 = m1 / (row + 1e-8) * p1
            col2 = jnp.sum(m2, axis=0, keepdims=True)
            ok2 = jnp.max(jnp.abs(col2 - p2)) <= 0.01
            new_m = jnp.where(ok1, m1, m2)
            new_done = jnp.logical_or(ok1, ok2).astype(jnp.float32)
            return jnp.where(done > 0.5, m, new_m), jnp.maximum(done, new_done)

        mf, _ = lax.fori_loop(0, n_iters, body, (m0, jnp.float32(0.0)))
        outs.append(mf)
    return jnp.stack(outs, axis=-1)


# ----------------------------- parameter init --------------------------------
def init_mlp_params(key, dim, hidden_dim, output_dim, layers):
    dims = [dim] + [hidden_dim] * (layers + 1) + [output_dim]
    params = []
    for i in range(len(dims) - 1):
        key, kw, kb = jax.random.split(key, 3)
        w = jax.random.normal(kw, (dims[i], dims[i + 1]), jnp.float32) \
            * (1.0 / math.sqrt(dims[i]))
        b = jax.random.normal(kb, (1, dims[i + 1]), jnp.float32) * 0.01
        params += [w, b]
    return params


if __name__ == "__main__":
    key = jax.random.PRNGKey(0)
    A, B_batch = 8, 8
    x1_dim, x2_dim = 16, 12
    hidden_dim, embed_dim, num_labels, layers = 32, 8, 3, 1
    activation = "relu"

    key, k1, k2, k3, k4, kp1, kp2 = jax.random.split(key, 7)
    x1 = jax.random.normal(k1, (A, x1_dim), jnp.float32)
    x2 = jax.random.normal(k2, (B_batch, x2_dim), jnp.float32)
    # per-label distributions over the batch dimension (columns sum to 1)
    x1_probs = jax.nn.softmax(
        jax.random.normal(k3, (A, num_labels), jnp.float32), axis=0)
    x2_probs = jax.nn.softmax(
        jax.random.normal(k4, (B_batch, num_labels), jnp.float32), axis=0)

    params1 = init_mlp_params(kp1, x1_dim, hidden_dim, embed_dim * num_labels, layers)
    params2 = init_mlp_params(kp2, x2_dim, hidden_dim, embed_dim * num_labels, layers)

    out = ce_alignment_forward(x1, x2, x1_probs, x2_probs, params1, params2,
                               num_labels, activation)
    out = jax.block_until_ready(out)

    ref = reference_forward(x1, x2, x1_probs, x2_probs, params1, params2,
                            num_labels, activation)
    ref = jax.block_until_ready(ref)

    assert out.shape == (A, B_batch, num_labels)
    assert bool(jnp.all(jnp.isfinite(out)))
    max_err = float(jnp.max(jnp.abs(out - ref)))
    assert bool(jnp.allclose(out, ref, atol=2e-3, rtol=2e-3)), max_err
    print("KERNEL_OK")
</pallas_src>

<mosaic_0001>
module attributes {stable_mosaic.version = 11 : i64} {
  func.func @kernel(%arg0: memref<8x16xf32, #tpu.memory_space<vmem>>, %arg1: memref<8x12xf32, #tpu.memory_space<vmem>>, %arg2: memref<3x8x1xf32, #tpu.memory_space<vmem>>, %arg3: memref<3x1x8xf32, #tpu.memory_space<vmem>>, %arg4: memref<16x32xf32, #tpu.memory_space<vmem>>, %arg5: memref<1x32xf32, #tpu.memory_space<vmem>>, %arg6: memref<32x32xf32, #tpu.memory_space<vmem>>, %arg7: memref<1x32xf32, #tpu.memory_space<vmem>>, %arg8: memref<32x24xf32, #tpu.memory_space<vmem>>, %arg9: memref<1x24xf32, #tpu.memory_space<vmem>>, %arg10: memref<12x32xf32, #tpu.memory_space<vmem>>, %arg11: memref<1x32xf32, #tpu.memory_space<vmem>>, %arg12: memref<32x32xf32, #tpu.memory_space<vmem>>, %arg13: memref<1x32xf32, #tpu.memory_space<vmem>>, %arg14: memref<32x24xf32, #tpu.memory_space<vmem>>, %arg15: memref<1x24xf32, #tpu.memory_space<vmem>>, %arg16: memref<3x8x8xf32, #tpu.memory_space<vmem>>) attributes {dimension_semantics = [], scalar_prefetch = 0 : i64, scratch_operands = 0 : i64, tpu.core_type = #tpu.core_type<tc>} {
    %c0 = arith.constant 0 : index
    %c0_0 = arith.constant 0 : index
    %0 = vector.load %arg0[%c0, %c0_0] : memref<8x16xf32, #tpu.memory_space<vmem>>, vector<8x16xf32>
    %c0_1 = arith.constant 0 : index
    %c0_2 = arith.constant 0 : index
    %1 = vector.load %arg4[%c0_1, %c0_2] : memref<16x32xf32, #tpu.memory_space<vmem>>, vector<16x32xf32>
    %c0_3 = arith.constant 0 : index
    %c0_4 = arith.constant 0 : index
    %2 = vector.load %arg5[%c0_3, %c0_4] : memref<1x32xf32, #tpu.memory_space<vmem>>, vector<1x32xf32>
    %cst = arith.constant dense<0.000000e+00> : vector<8x32xf32>
    %3 = tpu.matmul %0, %1, %cst {dimension_numbers = #tpu.dot_dimension_numbers<[1], [0], [0], [1], [0, 0, 1, 1], [], []>} : vector<8x16xf32>, vector<16x32xf32>, vector<8x32xf32> -> vector<8x32xf32>
    %4 = vector.broadcast %2 : vector<1x32xf32> to vector<8x32xf32>
    %5 = arith.addf %3, %4 : vector<8x32xf32>
    %cst_5 = arith.constant 0.000000e+00 : f32
    %6 = vector.broadcast %cst_5 : f32 to vector<8x32xf32>
    %7 = arith.maximumf %5, %6 : vector<8x32xf32>
    %c0_6 = arith.constant 0 : index
    %c0_7 = arith.constant 0 : index
    %8 = vector.load %arg6[%c0_6, %c0_7] : memref<32x32xf32, #tpu.memory_space<vmem>>, vector<32x32xf32>
    %c0_8 = arith.constant 0 : index
    %c0_9 = arith.constant 0 : index
    %9 = vector.load %arg7[%c0_8, %c0_9] : memref<1x32xf32, #tpu.memory_space<vmem>>, vector<1x32xf32>
    %cst_10 = arith.constant dense<0.000000e+00> : vector<8x32xf32>
    %10 = tpu.matmul %7, %8, %cst_10 {dimension_numbers = #tpu.dot_dimension_numbers<[1], [0], [0], [1], [0, 0, 1, 1], [], []>} : vector<8x32xf32>, vector<32x32xf32>, vector<8x32xf32> -> vector<8x32xf32>
    %11 = vector.broadcast %9 : vector<1x32xf32> to vector<8x32xf32>
    %12 = arith.addf %10, %11 : vector<8x32xf32>
    %cst_11 = arith.constant 0.000000e+00 : f32
    %13 = vector.broadcast %cst_11 : f32 to vector<8x32xf32>
    %14 = arith.maximumf %12, %13 : vector<8x32xf32>
    %c0_12 = arith.constant 0 : index
    %c0_13 = arith.constant 0 : index
    %15 = vector.load %arg8[%c0_12, %c0_13] : memref<32x24xf32, #tpu.memory_space<vmem>>, vector<32x24xf32>
    %c0_14 = arith.constant 0 : index
    %c0_15 = arith.constant 0 : index
    %16 = vector.load %arg9[%c0_14, %c0_15] : memref<1x24xf32, #tpu.memory_space<vmem>>, vector<1x24xf32>
    %cst_16 = arith.constant dense<0.000000e+00> : vector<8x24xf32>
    %17 = tpu.matmul %14, %15, %cst_16 {dimension_numbers = #tpu.dot_dimension_numbers<[1], [0], [0], [1], [0, 0, 1, 1], [], []>} : vector<8x32xf32>, vector<32x24xf32>, vector<8x24xf32> -> vector<8x24xf32>
    %18 = vector.broadcast %16 : vector<1x24xf32> to vector<8x24xf32>
    %19 = arith.addf %17, %18 : vector<8x24xf32>
    %c0_17 = arith.constant 0 : index
    %c0_18 = arith.constant 0 : index
    %20 = vector.load %arg1[%c0_17, %c0_18] : memref<8x12xf32, #tpu.memory_space<vmem>>, vector<8x12xf32>
    %c0_19 = arith.constant 0 : index
    %c0_20 = arith.constant 0 : index
    %21 = vector.load %arg10[%c0_19, %c0_20] : memref<12x32xf32, #tpu.memory_space<vmem>>, vector<12x32xf32>
    %c0_21 = arith.constant 0 : index
    %c0_22 = arith.constant 0 : index
    %22 = vector.load %arg11[%c0_21, %c0_22] : memref<1x32xf32, #tpu.memory_space<vmem>>, vector<1x32xf32>
    %cst_23 = arith.constant dense<0.000000e+00> : vector<8x32xf32>
    %23 = tpu.matmul %20, %21, %cst_23 {dimension_numbers = #tpu.dot_dimension_numbers<[1], [0], [0], [1], [0, 0, 1, 1], [], []>} : vector<8x12xf32>, vector<12x32xf32>, vector<8x32xf32> -> vector<8x32xf32>
    %24 = vector.broadcast %22 : vector<1x32xf32> to vector<8x32xf32>
    %25 = arith.addf %23, %24 : vector<8x32xf32>
    %cst_24 = arith.constant 0.000000e+00 : f32
    %26 = vector.broadcast %cst_24 : f32 to vector<8x32xf32>
    %27 = arith.maximumf %25, %26 : vector<8x32xf32>
    %c0_25 = arith.constant 0 : index
    %c0_26 = arith.constant 0 : index
    %28 = vector.load %arg12[%c0_25, %c0_26] : memref<32x32xf32, #tpu.memory_space<vmem>>, vector<32x32xf32>
    %c0_27 = arith.constant 0 : index
    %c0_28 = arith.constant 0 : index
    %29 = vector.load %arg13[%c0_27, %c0_28] : memref<1x32xf32, #tpu.memory_space<vmem>>, vector<1x32xf32>
    %cst_29 = arith.constant dense<0.000000e+00> : vector<8x32xf32>
    %30 = tpu.matmul %27, %28, %cst_29 {dimension_numbers = #tpu.dot_dimension_numbers<[1], [0], [0], [1], [0, 0, 1, 1], [], []>} : vector<8x32xf32>, vector<32x32xf32>, vector<8x32xf32> -> vector<8x32xf32>
    %31 = vector.broadcast %29 : vector<1x32xf32> to vector<8x32xf32>
    %32 = arith.addf %30, %31 : vector<8x32xf32>
    %cst_30 = arith.constant 0.000000e+00 : f32
    %33 = vector.broadcast %cst_30 : f32 to vector<8x32xf32>
    %34 = arith.maximumf %32, %33 : vector<8x32xf32>
    %c0_31 = arith.constant 0 : index
    %c0_32 = arith.constant 0 : index
    %35 = vector.load %arg14[%c0_31, %c0_32] : memref<32x24xf32, #tpu.memory_space<vmem>>, vector<32x24xf32>
    %c0_33 = arith.constant 0 : index
    %c0_34 = arith.constant 0 : index
    %36 = vector.load %arg15[%c0_33, %c0_34] : memref<1x24xf32, #tpu.memory_space<vmem>>, vector<1x24xf32>
    %cst_35 = arith.constant dense<0.000000e+00> : vector<8x24xf32>
    %37 = tpu.matmul %34, %35, %cst_35 {dimension_numbers = #tpu.dot_dimension_numbers<[1], [0], [0], [1], [0, 0, 1, 1], [], []>} : vector<8x32xf32>, vector<32x24xf32>, vector<8x24xf32> -> vector<8x24xf32>
    %38 = vector.broadcast %36 : vector<1x24xf32> to vector<8x24xf32>
    %39 = arith.addf %37, %38 : vector<8x24xf32>
    %40 = vector.extract_strided_slice %19 {offsets = [0, 0], sizes = [8, 8], strides = [1, 1]} : vector<8x24xf32> to vector<8x8xf32>
    %cst_36 = arith.constant dense<0.000000e+00> : vector<8xf32>
    %41 = vector.multi_reduction <add>, %40, %cst_36 [1] : vector<8x8xf32> to vector<8xf32>
    %42 = vector.shape_cast %41 : vector<8xf32> to vector<8x1xf32>
    %cst_37 = arith.constant 8.000000e+00 : f32
    %43 = vector.broadcast %cst_37 : f32 to vector<8x1xf32>
    %44 = arith.divf %42, %43 : vector<8x1xf32>
    %45 = vector.broadcast %44 : vector<8x1xf32> to vector<8x8xf32>
    %46 = arith.subf %40, %45 : vector<8x8xf32>
    %47 = arith.mulf %46, %46 : vector<8x8xf32>
    %cst_38 = arith.constant dense<0.000000e+00> : vector<8xf32>
    %48 = vector.multi_reduction <add>, %47, %cst_38 [1] : vector<8x8xf32> to vector<8xf32>
    %49 = vector.shape_cast %48 : vector<8xf32> to vector<8x1xf32>
    %cst_39 = arith.constant 7.000000e+00 : f32
    %50 = vector.broadcast %cst_39 : f32 to vector<8x1xf32>
    %51 = arith.divf %49, %50 : vector<8x1xf32>
    %52 = vector.broadcast %44 : vector<8x1xf32> to vector<8x8xf32>
    %53 = arith.subf %40, %52 : vector<8x8xf32>
    %cst_40 = arith.constant 9.99999993E-9 : f32
    %54 = vector.broadcast %cst_40 : f32 to vector<8x1xf32>
    %55 = arith.addf %51, %54 : vector<8x1xf32>
    %56 = math.sqrt %55 : vector<8x1xf32>
    %57 = vector.broadcast %56 : vector<8x1xf32> to vector<8x8xf32>
    %58 = arith.divf %53, %57 : vector<8x8xf32>
    %59 = vector.extract_strided_slice %39 {offsets = [0, 0], sizes = [8, 8], strides = [1, 1]} : vector<8x24xf32> to vector<8x8xf32>
    %cst_41 = arith.constant dense<0.000000e+00> : vector<8xf32>
    %60 = vector.multi_reduction <add>, %59, %cst_41 [1] : vector<8x8xf32> to vector<8xf32>
    %61 = vector.shape_cast %60 : vector<8xf32> to vector<8x1xf32>
    %cst_42 = arith.constant 8.000000e+00 : f32
    %62 = vector.broadcast %cst_42 : f32 to vector<8x1xf32>
    %63 = arith.divf %61, %62 : vector<8x1xf32>
    %64 = vector.broadcast %63 : vector<8x1xf32> to vector<8x8xf32>
    %65 = arith.subf %59, %64 : vector<8x8xf32>
    %66 = arith.mulf %65, %65 : vector<8x8xf32>
    %cst_43 = arith.constant dense<0.000000e+00> : vector<8xf32>
    %67 = vector.multi_reduction <add>, %66, %cst_43 [1] : vector<8x8xf32> to vector<8xf32>
    %68 = vector.shape_cast %67 : vector<8xf32> to vector<8x1xf32>
    %cst_44 = arith.constant 7.000000e+00 : f32
    %69 = vector.broadcast %cst_44 : f32 to vector<8x1xf32>
    %70 = arith.divf %68, %69 : vector<8x1xf32>
    %71 = vector.broadcast %63 : vector<8x1xf32> to vector<8x8xf32>
    %72 = arith.subf %59, %71 : vector<8x8xf32>
    %cst_45 = arith.constant 9.99999993E-9 : f32
    %73 = vector.broadcast %cst_45 : f32 to vector<8x1xf32>
    %74 = arith.addf %70, %73 : vector<8x1xf32>
    %75 = math.sqrt %74 : vector<8x1xf32>
    %76 = vector.broadcast %75 : vector<8x1xf32> to vector<8x8xf32>
    %77 = arith.divf %72, %76 : vector<8x8xf32>
    %cst_46 = arith.constant dense<0.000000e+00> : vector<8x8xf32>
    %78 = tpu.matmul %58, %77, %cst_46 {dimension_numbers = #tpu.dot_dimension_numbers<[1], [1], [0], [0], [0, 0, 1, 0], [], []>} : vector<8x8xf32>, vector<8x8xf32>, vector<8x8xf32> -> vector<8x8xf32>
    %cst_47 = arith.constant 0.353553385 : f32
    %79 = vector.broadcast %cst_47 : f32 to vector<8x8xf32>
    %80 = arith.mulf %78, %79 : vector<8x8xf32>
    %81 = math.exp %80 : vector<8x8xf32>
    %82 = vector.shape_cast %81 : vector<8x8xf32> to vector<1x8x8xf32>
    %83 = vector.extract_strided_slice %19 {offsets = [0, 8], sizes = [8, 8], strides = [1, 1]} : vector<8x24xf32> to vector<8x8xf32>
    %cst_48 = arith.constant dense<0.000000e+00> : vector<8xf32>
    %84 = vector.multi_reduction <add>, %83, %cst_48 [1] : vector<8x8xf32> to vector<8xf32>
    %85 = vector.shape_cast %84 : vector<8xf32> to vector<8x1xf32>
    %cst_49 = arith.constant 8.000000e+00 : f32
    %86 = vector.broadcast %cst_49 : f32 to vector<8x1xf32>
    %87 = arith.divf %85, %86 : vector<8x1xf32>
    %88 = vector.broadcast %87 : vector<8x1xf32> to vector<8x8xf32>
    %89 = arith.subf %83, %88 : vector<8x8xf32>
    %90 = arith.mulf %89, %89 : vector<8x8xf32>
    %cst_50 = arith.constant dense<0.000000e+00> : vector<8xf32>
    %91 = vector.multi_reduction <add>, %90, %cst_50 [1] : vector<8x8xf32> to vector<8xf32>
    %92 = vector.shape_cast %91 : vector<8xf32> to vector<8x1xf32>
    %cst_51 = arith.constant 7.000000e+00 : f32
    %93 = vector.broadcast %cst_51 : f32 to vector<8x1xf32>
    %94 = arith.divf %92, %93 : vector<8x1xf32>
    %95 = vector.broadcast %87 : vector<8x1xf32> to vector<8x8xf32>
    %96 = arith.subf %83, %95 : vector<8x8xf32>
    %cst_52 = arith.constant 9.99999993E-9 : f32
    %97 = vector.broadcast %cst_52 : f32 to vector<8x1xf32>
    %98 = arith.addf %94, %97 : vector<8x1xf32>
    %99 = math.sqrt %98 : vector<8x1xf32>
    %100 = vector.broadcast %99 : vector<8x1xf32> to vector<8x8xf32>
    %101 = arith.divf %96, %100 : vector<8x8xf32>
    %102 = vector.extract_strided_slice %39 {offsets = [0, 8], sizes = [8, 8], strides = [1, 1]} : vector<8x24xf32> to vector<8x8xf32>
    %cst_53 = arith.constant dense<0.000000e+00> : vector<8xf32>
    %103 = vector.multi_reduction <add>, %102, %cst_53 [1] : vector<8x8xf32> to vector<8xf32>
    %104 = vector.shape_cast %103 : vector<8xf32> to vector<8x1xf32>
    %cst_54 = arith.constant 8.000000e+00 : f32
    %105 = vector.broadcast %cst_54 : f32 to vector<8x1xf32>
    %106 = arith.divf %104, %105 : vector<8x1xf32>
    %107 = vector.broadcast %106 : vector<8x1xf32> to vector<8x8xf32>
    %108 = arith.subf %102, %107 : vector<8x8xf32>
    %109 = arith.mulf %108, %108 : vector<8x8xf32>
    %cst_55 = arith.constant dense<0.000000e+00> : vector<8xf32>
    %110 = vector.multi_reduction <add>, %109, %cst_55 [1] : vector<8x8xf32> to vector<8xf32>
    %111 = vector.shape_cast %110 : vector<8xf32> to vector<8x1xf32>
    %cst_56 = arith.constant 7.000000e+00 : f32
    %112 = vector.broadcast %cst_56 : f32 to vector<8x1xf32>
    %113 = arith.divf %111, %112 : vector<8x1xf32>
    %114 = vector.broadcast %106 : vector<8x1xf32> to vector<8x8xf32>
    %115 = arith.subf %102, %114 : vector<8x8xf32>
    %cst_57 = arith.constant 9.99999993E-9 : f32
    %116 = vector.broadcast %cst_57 : f32 to vector<8x1xf32>
    %117 = arith.addf %113, %116 : vector<8x1xf32>
    %118 = math.sqrt %117 : vector<8x1xf32>
    %119 = vector.broadcast %118 : vector<8x1xf32> to vector<8x8xf32>
    %120 = arith.divf %115, %119 : vector<8x8xf32>
    %cst_58 = arith.constant dense<0.000000e+00> : vector<8x8xf32>
    %121 = tpu.matmul %101, %120, %cst_58 {dimension_numbers = #tpu.dot_dimension_numbers<[1], [1], [0], [0], [0, 0, 1, 0], [], []>} : vector<8x8xf32>, vector<8x8xf32>, vector<8x8xf32> -> vector<8x8xf32>
    %cst_59 = arith.constant 0.353553385 : f32
    %122 = vector.broadcast %cst_59 : f32 to vector<8x8xf32>
    %123 = arith.mulf %121, %122 : vector<8x8xf32>
    %124 = math.exp %123 : vector<8x8xf32>
    %125 = vector.shape_cast %124 : vector<8x8xf32> to vector<1x8x8xf32>
    %126 = vector.extract_strided_slice %19 {offsets = [0, 16], sizes = [8, 8], strides = [1, 1]} : vector<8x24xf32> to vector<8x8xf32>
    %cst_60 = arith.constant dense<0.000000e+00> : vector<8xf32>
    %127 = vector.multi_reduction <add>, %126, %cst_60 [1] : vector<8x8xf32> to vector<8xf32>
    %128 = vector.shape_cast %127 : vector<8xf32> to vector<8x1xf32>
    %cst_61 = arith.constant 8.000000e+00 : f32
    %129 = vector.broadcast %cst_61 : f32 to vector<8x1xf32>
    %130 = arith.divf %128, %129 : vector<8x1xf32>
    %131 = vector.broadcast %130 : vector<8x1xf32> to vector<8x8xf32>
    %132 = arith.subf %126, %131 : vector<8x8xf32>
    %133 = arith.mulf %132, %132 : vector<8x8xf32>
    %cst_62 = arith.constant dense<0.000000e+00> : vector<8xf32>
    %134 = vector.multi_reduction <add>, %133, %cst_62 [1] : vector<8x8xf32> to vector<8xf32>
    %135 = vector.shape_cast %134 : vector<8xf32> to vector<8x1xf32>
    %cst_63 = arith.constant 7.000000e+00 : f32
    %136 = vector.broadcast %cst_63 : f32 to vector<8x1xf32>
    %137 = arith.divf %135, %136 : vector<8x1xf32>
    %138 = vector.broadcast %130 : vector<8x1xf32> to vector<8x8xf32>
    %139 = arith.subf %126, %138 : vector<8x8xf32>
    %cst_64 = arith.constant 9.99999993E-9 : f32
    %140 = vector.broadcast %cst_64 : f32 to vector<8x1xf32>
    %141 = arith.addf %137, %140 : vector<8x1xf32>
    %142 = math.sqrt %141 : vector<8x1xf32>
    %143 = vector.broadcast %142 : vector<8x1xf32> to vector<8x8xf32>
    %144 = arith.divf %139, %143 : vector<8x8xf32>
    %145 = vector.extract_strided_slice %39 {offsets = [0, 16], sizes = [8, 8], strides = [1, 1]} : vector<8x24xf32> to vector<8x8xf32>
    %cst_65 = arith.constant dense<0.000000e+00> : vector<8xf32>
    %146 = vector.multi_reduction <add>, %145, %cst_65 [1] : vector<8x8xf32> to vector<8xf32>
    %147 = vector.shape_cast %146 : vector<8xf32> to vector<8x1xf32>
    %cst_66 = arith.constant 8.000000e+00 : f32
    %148 = vector.broadcast %cst_66 : f32 to vector<8x1xf32>
    %149 = arith.divf %147, %148 : vector<8x1xf32>
    %150 = vector.broadcast %149 : vector<8x1xf32> to vector<8x8xf32>
    %151 = arith.subf %145, %150 : vector<8x8xf32>
    %152 = arith.mulf %151, %151 : vector<8x8xf32>
    %cst_67 = arith.constant dense<0.000000e+00> : vector<8xf32>
    %153 = vector.multi_reduction <add>, %152, %cst_67 [1] : vector<8x8xf32> to vector<8xf32>
    %154 = vector.shape_cast %153 : vector<8xf32> to vector<8x1xf32>
    %cst_68 = arith.constant 7.000000e+00 : f32
    %155 = vector.broadcast %cst_68 : f32 to vector<8x1xf32>
    %156 = arith.divf %154, %155 : vector<8x1xf32>
    %157 = vector.broadcast %149 : vector<8x1xf32> to vector<8x8xf32>
    %158 = arith.subf %145, %157 : vector<8x8xf32>
    %cst_69 = arith.constant 9.99999993E-9 : f32
    %159 = vector.broadcast %cst_69 : f32 to vector<8x1xf32>
    %160 = arith.addf %156, %159 : vector<8x1xf32>
    %161 = math.sqrt %160 : vector<8x1xf32>
    %162 = vector.broadcast %161 : vector<8x1xf32> to vector<8x8xf32>
    %163 = arith.divf %158, %162 : vector<8x8xf32>
    %cst_70 = arith.constant dense<0.000000e+00> : vector<8x8xf32>
    %164 = tpu.matmul %144, %163, %cst_70 {dimension_numbers = #tpu.dot_dimension_numbers<[1], [1], [0], [0], [0, 0, 1, 0], [], []>} : vector<8x8xf32>, vector<8x8xf32>, vector<8x8xf32> -> vector<8x8xf32>
    %cst_71 = arith.constant 0.353553385 : f32
    %165 = vector.broadcast %cst_71 : f32 to vector<8x8xf32>
    %166 = arith.mulf %164, %165 : vector<8x8xf32>
    %167 = math.exp %166 : vector<8x8xf32>
    %168 = vector.shape_cast %167 : vector<8x8xf32> to vector<1x8x8xf32>
    %169 = tpu.concatenate %82, %125, %168 in 0 : vector<1x8x8xf32>, vector<1x8x8xf32>, vector<1x8x8xf32> -> vector<3x8x8xf32>
    %c0_72 = arith.constant 0 : index
    %c0_73 = arith.constant 0 : index
    %c0_74 = arith.constant 0 : index
    %170 = vector.load %arg2[%c0_72, %c0_73, %c0_74] : memref<3x8x1xf32, #tpu.memory_space<vmem>>, vector<3x8x1xf32>
    %c0_75 = arith.constant 0 : index
    %c0_76 = arith.constant 0 : index
    %c0_77 = arith.constant 0 : index
    %171 = vector.load %arg3[%c0_75, %c0_76, %c0_77] : memref<3x1x8xf32, #tpu.memory_space<vmem>>, vector<3x1x8xf32>
    %cst_78 = arith.constant 0.000000e+00 : f32
    %172 = vector.broadcast %cst_78 : f32 to vector<3x1x1xf32>
    %c0_i32 = arith.constant 0 : i32
    %173:3 = scf.while (%arg17 = %169, %arg18 = %172, %arg19 = %c0_i32) : (vector<3x8x8xf32>, vector<3x1x1xf32>, i32) -> (vector<3x8x8xf32>, vector<3x1x1xf32>, i32) {
      %c500_i32 = arith.constant 500 : i32
      %175 = arith.cmpi slt, %arg19, %c500_i32 : i32
      %176 = vector.shape_cast %arg18 : vector<3x1x1xf32> to vector<1x3x1x1xf32>
      %cst_82 = arith.constant dense<0x7F800000> : vector<1xf32>
      %177 = vector.multi_reduction <minimumf>, %176, %cst_82 [1, 2, 3] : vector<1x3x1x1xf32> to vector<1xf32>
      %178 = vector.shape_cast %177 : vector<1xf32> to vector<1x1x1x1xf32>
      %179 = vector.extract %178[0, 0, 0, 0] : f32 from vector<1x1x1x1xf32>
      %cst_83 = arith.constant 5.000000e-01 : f32
      %180 = arith.cmpf olt, %179, %cst_83 : f32
      %181 = arith.andi %175, %180 : i1
      scf.condition(%181) %arg17, %arg18, %arg19 : vector<3x8x8xf32>, vector<3x1x1xf32>, i32
    } do {
    ^bb0(%arg17: vector<3x8x8xf32>, %arg18: vector<3x1x1xf32>, %arg19: i32):
      %cst_82 = arith.constant dense<0.000000e+00> : vector<3x8xf32>
      %175 = vector.multi_reduction <add>, %arg17, %cst_82 [1] : vector<3x8x8xf32> to vector<3x8xf32>
      %176 = vector.shape_cast %175 : vector<3x8xf32> to vector<3x1x8xf32>
      %cst_83 = arith.constant 9.99999993E-9 : f32
      %177 = vector.broadcast %cst_83 : f32 to vector<3x1x8xf32>
      %178 = arith.addf %176, %177 : vector<3x1x8xf32>
      %179 = tpu.reciprocal %178 : vector<3x1x8xf32> -> vector<3x1x8xf32>
      %180 = arith.mulf %171, %179 : vector<3x1x8xf32>
      %181 = vector.broadcast %180 : vector<3x1x8xf32> to vector<3x8x8xf32>
      %182 = arith.mulf %arg17, %181 : vector<3x8x8xf32>
      %cst_84 = arith.constant dense<0.000000e+00> : vector<3x8xf32>
      %183 = vector.multi_reduction <add>, %182, %cst_84 [2] : vector<3x8x8xf32> to vector<3x8xf32>
      %184 = vector.shape_cast %183 : vector<3x8xf32> to vector<3x8x1xf32>
      %185 = arith.subf %184, %170 : vector<3x8x1xf32>
      %186 = math.absf %185 : vector<3x8x1xf32>
      %cst_85 = arith.constant dense<0xFF800000> : vector<3x1xf32>
      %187 = vector.multi_reduction <maximumf>, %186, %cst_85 [1] : vector<3x8x1xf32> to vector<3x1xf32>
      %188 = vector.shape_cast %187 : vector<3x1xf32> to vector<3x1x1xf32>
      %cst_86 = arith.constant 0.00999999977 : f32
      %189 = vector.broadcast %cst_86 : f32 to vector<3x1x1xf32>
      %190 = arith.cmpf ole, %188, %189 : vector<3x1x1xf32>
      %191 = arith.extui %190 : vector<3x1x1xi1> to vector<3x1x1xi32>
      %192 = arith.sitofp %191 : vector<3x1x1xi32> to vector<3x1x1xf32>
      %cst_87 = arith.constant 9.99999993E-9 : f32
      %193 = vector.broadcast %cst_87 : f32 to vector<3x8x1xf32>
      %194 = arith.addf %184, %193 : vector<3x8x1xf32>
      %195 = tpu.reciprocal %194 : vector<3x8x1xf32> -> vector<3x8x1xf32>
      %196 = arith.mulf %170, %195 : vector<3x8x1xf32>
      %197 = vector.broadcast %196 : vector<3x8x1xf32> to vector<3x8x8xf32>
      %198 = arith.mulf %182, %197 : vector<3x8x8xf32>
      %cst_88 = arith.constant dense<0.000000e+00> : vector<3x8xf32>
      %199 = vector.multi_reduction <add>, %198, %cst_88 [1] : vector<3x8x8xf32> to vector<3x8xf32>
      %200 = vector.shape_cast %199 : vector<3x8xf32> to vector<3x1x8xf32>
      %201 = arith.subf %200, %171 : vector<3x1x8xf32>
      %202 = math.absf %201 : vector<3x1x8xf32>
      %cst_89 = arith.constant dense<0xFF800000> : vector<3x1xf32>
      %203 = vector.multi_reduction <maximumf>, %202, %cst_89 [2] : vector<3x1x8xf32> to vector<3x1xf32>
      %204 = vector.shape_cast %203 : vector<3x1xf32> to vector<3x1x1xf32>
      %cst_90 = arith.constant 0.00999999977 : f32
      %205 = vector.broadcast %cst_90 : f32 to vector<3x1x1xf32>
      %206 = arith.cmpf ole, %204, %205 : vector<3x1x1xf32>
      %207 = arith.extui %206 : vector<3x1x1xi1> to vector<3x1x1xi32>
      %208 = arith.sitofp %207 : vector<3x1x1xi32> to vector<3x1x1xf32>
      %209 = vector.broadcast %192 : vector<3x1x1xf32> to vector<3x8x8xf32>
      %210 = arith.mulf %209, %182 : vector<3x8x8xf32>
      %cst_91 = arith.constant 1.000000e+00 : f32
      %211 = vector.broadcast %cst_91 : f32 to vector<3x1x1xf32>
      %212 = arith.subf %211, %192 : vector<3x1x1xf32>
      %213 = vector.broadcast %212 : vector<3x1x1xf32> to vector<3x8x8xf32>
      %214 = arith.mulf %213, %198 : vector<3x8x8xf32>
      %215 = arith.addf %210, %214 : vector<3x8x8xf32>
      %216 = arith.maximumf %192, %208 : vector<3x1x1xf32>
      %217 = vector.broadcast %arg18 : vector<3x1x1xf32> to vector<3x8x8xf32>
      %218 = arith.mulf %217, %arg17 : vector<3x8x8xf32>
      %cst_92 = arith.constant 1.000000e+00 : f32
      %219 = vector.broadcast %cst_92 : f32 to vector<3x1x1xf32>
      %220 = arith.subf %219, %arg18 : vector<3x1x1xf32>
      %221 = vector.broadcast %220 : vector<3x1x1xf32> to vector<3x8x8xf32>
      %222 = arith.mulf %221, %215 : vector<3x8x8xf32>
      %223 = arith.addf %218, %222 : vector<3x8x8xf32>
      %224 = arith.maximumf %arg18, %216 : vector<3x1x1xf32>
      %cst_93 = arith.constant dense<0.000000e+00> : vector<3x8xf32>
      %225 = vector.multi_reduction <add>, %223, %cst_93 [1] : vector<3x8x8xf32> to vector<3x8xf32>
      %226 = vector.shape_cast %225 : vector<3x8xf32> to vector<3x1x8xf32>
      %cst_94 = arith.constant 9.99999993E-9 : f32
      %227 = vector.broadcast %cst_94 : f32 to vector<3x1x8xf32>
      %228 = arith.addf %226, %227 : vector<3x1x8xf32>
      %229 = tpu.reciprocal %228 : vector<3x1x8xf32> -> vector<3x1x8xf32>
      %230 = arith.mulf %171, %229 : vector<3x1x8xf32>
      %231 = vector.broadcast %230 : vector<3x1x8xf32> to vector<3x8x8xf32>
      %232 = arith.mulf %223, %231 : vector<3x8x8xf32>
      %cst_95 = arith.constant dense<0.000000e+00> : vector<3x8xf32>
      %233 = vector.multi_reduction <add>, %232, %cst_95 [2] : vector<3x8x8xf32> to vector<3x8xf32>
      %234 = vector.shape_cast %233 : vector<3x8xf32> to vector<3x8x1xf32>
      %235 = arith.subf %234, %170 : vector<3x8x1xf32>
      %236 = math.absf %235 : vector<3x8x1xf32>
      %cst_96 = arith.constant dense<0xFF800000> : vector<3x1xf32>
      %237 = vector.multi_reduction <maximumf>, %236, %cst_96 [1] : vector<3x8x1xf32> to vector<3x1xf32>
      %238 = vector.shape_cast %237 : vector<3x1xf32> to vector<3x1x1xf32>
      %cst_97 = arith.constant 0.00999999977 : f32
      %239 = vector.broadcast %cst_97 : f32 to vector<3x1x1xf32>
      %240 = arith.cmpf ole, %238, %239 : vector<3x1x1xf32>
      %241 = arith.extui %240 : vector<3x1x1xi1> to vector<3x1x1xi32>
      %242 = arith.sitofp %241 : vector<3x1x1xi32> to vector<3x1x1xf32>
      %cst_98 = arith.constant 9.99999993E-9 : f32
      %243 = vector.broadcast %cst_98 : f32 to vector<3x8x1xf32>
      %244 = arith.addf %234, %243 : vector<3x8x1xf32>
      %245 = tpu.reciprocal %244 : vector<3x8x1xf32> -> vector<3x8x1xf32>
      %246 = arith.mulf %170, %245 : vector<3x8x1xf32>
      %247 = vector.broadcast %246 : vector<3x8x1xf32> to vector<3x8x8xf32>
      %248 = arith.mulf %232, %247 : vector<3x8x8xf32>
      %cst_99 = arith.constant dense<0.000000e+00> : vector<3x8xf32>
      %249 = vector.multi_reduction <add>, %248, %cst_99 [1] : vector<3x8x8xf32> to vector<3x8xf32>
      %250 = vector.shape_cast %249 : vector<3x8xf32> to vector<3x1x8xf32>
      %251 = arith.subf %250, %171 : vector<3x1x8xf32>
      %252 = math.absf %251 : vector<3x1x8xf32>
      %cst_100 = arith.constant dense<0xFF800000> : vector<3x1xf32>
      %253 = vector.multi_reduction <maximumf>, %252, %cst_100 [2] : vector<3x1x8xf32> to vector<3x1xf32>
      %254 = vector.shape_cast %253 : vector<3x1xf32> to vector<3x1x1xf32>
      %cst_101 = arith.constant 0.00999999977 : f32
      %255 = vector.broadcast %cst_101 : f32 to vector<3x1x1xf32>
      %256 = arith.cmpf ole, %254, %255 : vector<3x1x1xf32>
      %257 = arith.extui %256 : vector<3x1x1xi1> to vector<3x1x1xi32>
      %258 = arith.sitofp %257 : vector<3x1x1xi32> to vector<3x1x1xf32>
      %259 = vector.broadcast %242 : vector<3x1x1xf32> to vector<3x8x8xf32>
      %260 = arith.mulf %259, %232 : vector<3x8x8xf32>
      %cst_102 = arith.constant 1.000000e+00 : f32
      %261 = vector.broadcast %cst_102 : f32 to vector<3x1x1xf32>
      %262 = arith.subf %261, %242 : vector<3x1x1xf32>
      %263 = vector.broadcast %262 : vector<3x1x1xf32> to vector<3x8x8xf32>
      %264 = arith.mulf %263, %248 : vector<3x8x8xf32>
      %265 = arith.addf %260, %264 : vector<3x8x8xf32>
      %266 = arith.maximumf %242, %258 : vector<3x1x1xf32>
      %267 = vector.broadcast %224 : vector<3x1x1xf32> to vector<3x8x8xf32>
      %268 = arith.mulf %267, %223 : vector<3x8x8xf32>
      %cst_103 = arith.constant 1.000000e+00 : f32
      %269 = vector.broadcast %cst_103 : f32 to vector<3x1x1xf32>
      %270 = arith.subf %269, %224 : vector<3x1x1xf32>
      %271 = vector.broadcast %270 : vector<3x1x1xf32> to vector<3x8x8xf32>
      %272 = arith.mulf %271, %265 : vector<3x8x8xf32>
      %273 = arith.addf %268, %272 : vector<3x8x8xf32>
      %274 = arith.maximumf %224, %266 : vector<3x1x1xf32>
      %cst_104 = arith.constant dense<0.000000e+00> : vector<3x8xf32>
      %275 = vector.multi_reduction <add>, %273, %cst_104 [1] : vector<3x8x8xf32> to vector<3x8xf32>
      %276 = vector.shape_cast %275 : vector<3x8xf32> to vector<3x1x8xf32>
      %cst_105 = arith.constant 9.99999993E-9 : f32
      %277 = vector.broadcast %cst_105 : f32 to vector<3x1x8xf32>
      %278 = arith.addf %276, %277 : vector<3x1x8xf32>
      %279 = tpu.reciprocal %278 : vector<3x1x8xf32> -> vector<3x1x8xf32>
      %280 = arith.mulf %171, %279 : vector<3x1x8xf32>
      %281 = vector.broadcast %280 : vector<3x1x8xf32> to vector<3x8x8xf32>
      %282 = arith.mulf %273, %281 : vector<3x8x8xf32>
      %cst_106 = arith.constant dense<0.000000e+00> : vector<3x8xf32>
      %283 = vector.multi_reduction <add>, %282, %cst_106 [2] : vector<3x8x8xf32> to vector<3x8xf32>
      %284 = vector.shape_cast %283 : vector<3x8xf32> to vector<3x8x1xf32>
      %285 = arith.subf %284, %170 : vector<3x8x1xf32>
      %286 = math.absf %285 : vector<3x8x1xf32>
      %cst_107 = arith.constant dense<0xFF800000> : vector<3x1xf32>
      %287 = vector.multi_reduction <maximumf>, %286, %cst_107 [1] : vector<3x8x1xf32> to vector<3x1xf32>
      %288 = vector.shape_cast %287 : vector<3x1xf32> to vector<3x1x1xf32>
      %cst_108 = arith.constant 0.00999999977 : f32
      %289 = vector.broadcast %cst_108 : f32 to vector<3x1x1xf32>
      %290 = arith.cmpf ole, %288, %289 : vector<3x1x1xf32>
      %291 = arith.extui %290 : vector<3x1x1xi1> to vector<3x1x1xi32>
      %292 = arith.sitofp %291 : vector<3x1x1xi32> to vector<3x1x1xf32>
      %cst_109 = arith.constant 9.99999993E-9 : f32
      %293 = vector.broadcast %cst_109 : f32 to vector<3x8x1xf32>
      %294 = arith.addf %284, %293 : vector<3x8x1xf32>
      %295 = tpu.reciprocal %294 : vector<3x8x1xf32> -> vector<3x8x1xf32>
      %296 = arith.mulf %170, %295 : vector<3x8x1xf32>
      %297 = vector.broadcast %296 : vector<3x8x1xf32> to vector<3x8x8xf32>
      %298 = arith.mulf %282, %297 : vector<3x8x8xf32>
      %cst_110 = arith.constant dense<0.000000e+00> : vector<3x8xf32>
      %299 = vector.multi_reduction <add>, %298, %cst_110 [1] : vector<3x8x8xf32> to vector<3x8xf32>
      %300 = vector.shape_cast %299 : vector<3x8xf32> to vector<3x1x8xf32>
      %301 = arith.subf %300, %171 : vector<3x1x8xf32>
      %302 = math.absf %301 : vector<3x1x8xf32>
      %cst_111 = arith.constant dense<0xFF800000> : vector<3x1xf32>
      %303 = vector.multi_reduction <maximumf>, %302, %cst_111 [2] : vector<3x1x8xf32> to vector<3x1xf32>
      %304 = vector.shape_cast %303 : vector<3x1xf32> to vector<3x1x1xf32>
      %cst_112 = arith.constant 0.00999999977 : f32
      %305 = vector.broadcast %cst_112 : f32 to vector<3x1x1xf32>
      %306 = arith.cmpf ole, %304, %305 : vector<3x1x1xf32>
      %307 = arith.extui %306 : vector<3x1x1xi1> to vector<3x1x1xi32>
      %308 = arith.sitofp %307 : vector<3x1x1xi32> to vector<3x1x1xf32>
      %309 = vector.broadcast %292 : vector<3x1x1xf32> to vector<3x8x8xf32>
      %310 = arith.mulf %309, %282 : vector<3x8x8xf32>
      %cst_113 = arith.constant 1.000000e+00 : f32
      %311 = vector.broadcast %cst_113 : f32 to vector<3x1x1xf32>
      %312 = arith.subf %311, %292 : vector<3x1x1xf32>
      %313 = vector.broadcast %312 : vector<3x1x1xf32> to vector<3x8x8xf32>
      %314 = arith.mulf %313, %298 : vector<3x8x8xf32>
      %315 = arith.addf %310, %314 : vector<3x8x8xf32>
      %316 = arith.maximumf %292, %308 : vector<3x1x1xf32>
      %317 = vector.broadcast %274 : vector<3x1x1xf32> to vector<3x8x8xf32>
      %318 = arith.mulf %317, %273 : vector<3x8x8xf32>
      %cst_114 = arith.constant 1.000000e+00 : f32
      %319 = vector.broadcast %cst_114 : f32 to vector<3x1x1xf32>
      %320 = arith.subf %319, %274 : vector<3x1x1xf32>
      %321 = vector.broadcast %320 : vector<3x1x1xf32> to vector<3x8x8xf32>
      %322 = arith.mulf %321, %315 : vector<3x8x8xf32>
      %323 = arith.addf %318, %322 : vector<3x8x8xf32>
      %324 = arith.maximumf %274, %316 : vector<3x1x1xf32>
      %cst_115 = arith.constant dense<0.000000e+00> : vector<3x8xf32>
      %325 = vector.multi_reduction <add>, %323, %cst_115 [1] : vector<3x8x8xf32> to vector<3x8xf32>
      %326 = vector.shape_cast %325 : vector<3x8xf32> to vector<3x1x8xf32>
      %cst_116 = arith.constant 9.99999993E-9 : f32
      %327 = vector.broadcast %cst_116 : f32 to vector<3x1x8xf32>
      %328 = arith.addf %326, %327 : vector<3x1x8xf32>
      %329 = tpu.reciprocal %328 : vector<3x1x8xf32> -> vector<3x1x8xf32>
      %330 = arith.mulf %171, %329 : vector<3x1x8xf32>
      %331 = vector.broadcast %330 : vector<3x1x8xf32> to vector<3x8x8xf32>
      %332 = arith.mulf %323, %331 : vector<3x8x8xf32>
      %cst_117 = arith.constant dense<0.000000e+00> : vector<3x8xf32>
      %333 = vector.multi_reduction <add>, %332, %cst_117 [2] : vector<3x8x8xf32> to vector<3x8xf32>
      %334 = vector.shape_cast %333 : vector<3x8xf32> to vector<3x8x1xf32>
      %335 = arith.subf %334, %170 : vector<3x8x1xf32>
      %336 = math.absf %335 : vector<3x8x1xf32>
      %cst_118 = arith.constant dense<0xFF800000> : vector<3x1xf32>
      %337 = vector.multi_reduction <maximumf>, %336, %cst_118 [1] : vector<3x8x1xf32> to vector<3x1xf32>
      %338 = vector.shape_cast %337 : vector<3x1xf32> to vector<3x1x1xf32>
      %cst_119 = arith.constant 0.00999999977 : f32
      %339 = vector.broadcast %cst_119 : f32 to vector<3x1x1xf32>
      %340 = arith.cmpf ole, %338, %339 : vector<3x1x1xf32>
      %341 = arith.extui %340 : vector<3x1x1xi1> to vector<3x1x1xi32>
      %342 = arith.sitofp %341 : vector<3x1x1xi32> to vector<3x1x1xf32>
      %cst_120 = arith.constant 9.99999993E-9 : f32
      %343 = vector.broadcast %cst_120 : f32 to vector<3x8x1xf32>
      %344 = arith.addf %334, %343 : vector<3x8x1xf32>
      %345 = tpu.reciprocal %344 : vector<3x8x1xf32> -> vector<3x8x1xf32>
      %346 = arith.mulf %170, %345 : vector<3x8x1xf32>
      %347 = vector.broadcast %346 : vector<3x8x1xf32> to vector<3x8x8xf32>
      %348 = arith.mulf %332, %347 : vector<3x8x8xf32>
      %cst_121 = arith.constant dense<0.000000e+00> : vector<3x8xf32>
      %349 = vector.multi_reduction <add>, %348, %cst_121 [1] : vector<3x8x8xf32> to vector<3x8xf32>
      %350 = vector.shape_cast %349 : vector<3x8xf32> to vector<3x1x8xf32>
      %351 = arith.subf %350, %171 : vector<3x1x8xf32>
      %352 = math.absf %351 : vector<3x1x8xf32>
      %cst_122 = arith.constant dense<0xFF800000> : vector<3x1xf32>
      %353 = vector.multi_reduction <maximumf>, %352, %cst_122 [2] : vector<3x1x8xf32> to vector<3x1xf32>
      %354 = vector.shape_cast %353 : vector<3x1xf32> to vector<3x1x1xf32>
      %cst_123 = arith.constant 0.00999999977 : f32
      %355 = vector.broadcast %cst_123 : f32 to vector<3x1x1xf32>
      %356 = arith.cmpf ole, %354, %355 : vector<3x1x1xf32>
      %357 = arith.extui %356 : vector<3x1x1xi1> to vector<3x1x1xi32>
      %358 = arith.sitofp %357 : vector<3x1x1xi32> to vector<3x1x1xf32>
      %359 = vector.broadcast %342 : vector<3x1x1xf32> to vector<3x8x8xf32>
      %360 = arith.mulf %359, %332 : vector<3x8x8xf32>
      %cst_124 = arith.constant 1.000000e+00 : f32
      %361 = vector.broadcast %cst_124 : f32 to vector<3x1x1xf32>
      %362 = arith.subf %361, %342 : vector<3x1x1xf32>
      %363 = vector.broadcast %362 : vector<3x1x1xf32> to vector<3x8x8xf32>
      %364 = arith.mulf %363, %348 : vector<3x8x8xf32>
      %365 = arith.addf %360, %364 : vector<3x8x8xf32>
      %366 = arith.maximumf %342, %358 : vector<3x1x1xf32>
      %367 = vector.broadcast %324 : vector<3x1x1xf32> to vector<3x8x8xf32>
      %368 = arith.mulf %367, %323 : vector<3x8x8xf32>
      %cst_125 = arith.constant 1.000000e+00 : f32
      %369 = vector.broadcast %cst_125 : f32 to vector<3x1x1xf32>
      %370 = arith.subf %369, %324 : vector<3x1x1xf32>
      %371 = vector.broadcast %370 : vector<3x1x1xf32> to vector<3x8x8xf32>
      %372 = arith.mulf %371, %365 : vector<3x8x8xf32>
      %373 = arith.addf %368, %372 : vector<3x8x8xf32>
      %374 = arith.maximumf %324, %366 : vector<3x1x1xf32>
      %cst_126 = arith.constant dense<0.000000e+00> : vector<3x8xf32>
      %375 = vector.multi_reduction <add>, %373, %cst_126 [1] : vector<3x8x8xf32> to vector<3x8xf32>
      %376 = vector.shape_cast %375 : vector<3x8xf32> to vector<3x1x8xf32>
      %cst_127 = arith.constant 9.99999993E-9 : f32
      %377 = vector.broadcast %cst_127 : f32 to vector<3x1x8xf32>
      %378 = arith.addf %376, %377 : vector<3x1x8xf32>
      %379 = tpu.reciprocal %378 : vector<3x1x8xf32> -> vector<3x1x8xf32>
      %380 = arith.mulf %171, %379 : vector<3x1x8xf32>
      %381 = vector.broadcast %380 : vector<3x1x8xf32> to vector<3x8x8xf32>
      %382 = arith.mulf %373, %381 : vector<3x8x8xf32>
      %cst_128 = arith.constant dense<0.000000e+00> : vector<3x8xf32>
      %383 = vector.multi_reduction <add>, %382, %cst_128 [2] : vector<3x8x8xf32> to vector<3x8xf32>
      %384 = vector.shape_cast %383 : vector<3x8xf32> to vector<3x8x1xf32>
      %385 = arith.subf %384, %170 : vector<3x8x1xf32>
      %386 = math.absf %385 : vector<3x8x1xf32>
      %cst_129 = arith.constant dense<0xFF800000> : vector<3x1xf32>
      %387 = vector.multi_reduction <maximumf>, %386, %cst_129 [1] : vector<3x8x1xf32> to vector<3x1xf32>
      %388 = vector.shape_cast %387 : vector<3x1xf32> to vector<3x1x1xf32>
      %cst_130 = arith.constant 0.00999999977 : f32
      %389 = vector.broadcast %cst_130 : f32 to vector<3x1x1xf32>
      %390 = arith.cmpf ole, %388, %389 : vector<3x1x1xf32>
      %391 = arith.extui %390 : vector<3x1x1xi1> to vector<3x1x1xi32>
      %392 = arith.sitofp %391 : vector<3x1x1xi32> to vector<3x1x1xf32>
      %cst_131 = arith.constant 9.99999993E-9 : f32
      %393 = vector.broadcast %cst_131 : f32 to vector<3x8x1xf32>
      %394 = arith.addf %384, %393 : vector<3x8x1xf32>
      %395 = tpu.reciprocal %394 : vector<3x8x1xf32> -> vector<3x8x1xf32>
      %396 = arith.mulf %170, %395 : vector<3x8x1xf32>
      %397 = vector.broadcast %396 : vector<3x8x1xf32> to vector<3x8x8xf32>
      %398 = arith.mulf %382, %397 : vector<3x8x8xf32>
      %cst_132 = arith.constant dense<0.000000e+00> : vector<3x8xf32>
      %399 = vector.multi_reduction <add>, %398, %cst_132 [1] : vector<3x8x8xf32> to vector<3x8xf32>
      %400 = vector.shape_cast %399 : vector<3x8xf32> to vector<3x1x8xf32>
      %401 = arith.subf %400, %171 : vector<3x1x8xf32>
      %402 = math.absf %401 : vector<3x1x8xf32>
      %cst_133 = arith.constant dense<0xFF800000> : vector<3x1xf32>
      %403 = vector.multi_reduction <maximumf>, %402, %cst_133 [2] : vector<3x1x8xf32> to vector<3x1xf32>
      %404 = vector.shape_cast %403 : vector<3x1xf32> to vector<3x1x1xf32>
      %cst_134 = arith.constant 0.00999999977 : f32
      %405 = vector.broadcast %cst_134 : f32 to vector<3x1x1xf32>
      %406 = arith.cmpf ole, %404, %405 : vector<3x1x1xf32>
      %407 = arith.extui %406 : vector<3x1x1xi1> to vector<3x1x1xi32>
      %408 = arith.sitofp %407 : vector<3x1x1xi32> to vector<3x1x1xf32>
      %409 = vector.broadcast %392 : vector<3x1x1xf32> to vector<3x8x8xf32>
      %410 = arith.mulf %409, %382 : vector<3x8x8xf32>
      %cst_135 = arith.constant 1.000000e+00 : f32
      %411 = vector.broadcast %cst_135 : f32 to vector<3x1x1xf32>
      %412 = arith.subf %411, %392 : vector<3x1x1xf32>
      %413 = vector.broadcast %412 : vector<3x1x1xf32> to vector<3x8x8xf32>
      %414 = arith.mulf %413, %398 : vector<3x8x8xf32>
      %415 = arith.addf %410, %414 : vector<3x8x8xf32>
      %416 = arith.maximumf %392, %408 : vector<3x1x1xf32>
      %417 = vector.broadcast %374 : vector<3x1x1xf32> to vector<3x8x8xf32>
      %418 = arith.mulf %417, %373 : vector<3x8x8xf32>
      %cst_136 = arith.constant 1.000000e+00 : f32
      %419 = vector.broadcast %cst_136 : f32 to vector<3x1x1xf32>
      %420 = arith.subf %419, %374 : vector<3x1x1xf32>
      %421 = vector.broadcast %420 : vector<3x1x1xf32> to vector<3x8x8xf32>
      %422 = arith.mulf %421, %415 : vector<3x8x8xf32>
      %423 = arith.addf %418, %422 : vector<3x8x8xf32>
      %424 = arith.maximumf %374, %416 : vector<3x1x1xf32>
      %c5_i32 = arith.constant 5 : i32
      %425 = arith.addi %arg19, %c5_i32 : i32
      scf.yield %423, %424, %425 : vector<3x8x8xf32>, vector<3x1x1xf32>, i32
    }
    %c0_79 = arith.constant 0 : index
    %c0_80 = arith.constant 0 : index
    %c0_81 = arith.constant 0 : index
    %174 = vector.load %arg16[%c0_79, %c0_80, %c0_81] : memref<3x8x8xf32, #tpu.memory_space<vmem>>, vector<3x8x8xf32>
    tpu.vector_store %arg16[%c0_79, %c0_80, %c0_81], %173#0 {strides = array<i32>} : memref<3x8x8xf32, #tpu.memory_space<vmem>>, vector<3x8x8xf32>,
    return
  }
}

</mosaic_0001>

<llo_original>
// kernel: tpu_custom_call.1
$region0: #{tpu_custom_call.1}
  #allocation0 [shape = 'u32[]', space=smem, size = 0x4, offset = 0x4, fixed_abs, tag = 'smem constant byte address 0x4 - core index']
  #allocation1 [shape = 'u32[144,128]{1,0:T(1,128)}', space=vmem, size = 0x12000, scoped, tag = 'internal scratch']
  %s0 = inlined_call_operand.vmem [shape: f32[8,16], index: 0, kind: input, shape index: {}]
  %s1 = inlined_call_operand.vmem [shape: f32[8,12], index: 1, kind: input, shape index: {}]
  %s2 = inlined_call_operand.vmem [shape: f32[3,8,1], index: 2, kind: input, shape index: {}]
  %s3 = inlined_call_operand.hbm [shape: f32[3,1,8], index: 3, kind: input, shape index: {}]
  %s4 = inlined_call_operand.vmem [shape: f32[16,32], index: 4, kind: input, shape index: {}]
  %s5 = inlined_call_operand.vmem [shape: f32[1,32], index: 5, kind: input, shape index: {}]
  %s6 = inlined_call_operand.vmem [shape: f32[32,32], index: 6, kind: input, shape index: {}]
  %s7 = inlined_call_operand.vmem [shape: f32[1,32], index: 7, kind: input, shape index: {}]
  %s8 = inlined_call_operand.vmem [shape: f32[32,24], index: 8, kind: input, shape index: {}]
  %s9 = inlined_call_operand.vmem [shape: f32[1,24], index: 9, kind: input, shape index: {}]
  %s10 = inlined_call_operand.vmem [shape: f32[12,32], index: 10, kind: input, shape index: {}]
  %s11 = inlined_call_operand.vmem [shape: f32[1,32], index: 11, kind: input, shape index: {}]
  %s12 = inlined_call_operand.vmem [shape: f32[32,32], index: 12, kind: input, shape index: {}]
  %s13 = inlined_call_operand.vmem [shape: f32[1,32], index: 13, kind: input, shape index: {}]
  %s14 = inlined_call_operand.vmem [shape: f32[32,24], index: 14, kind: input, shape index: {}]
  %s15 = inlined_call_operand.vmem [shape: f32[1,24], index: 15, kind: input, shape index: {}]
  %s16 = inlined_call_operand.hbm [shape: f32[3,8,8], index: 16, kind: output, shape index: {}]
  %s17 = sld [smem:[#allocation0]]
  $region85: #{tpu_custom_call.1} parent=0
    _
  %s19 = ssub.s32 1, %s17
  %s20 = scalar_select 0, %s19, %s17
  $region1: #{tpu_custom_call.1} parent=0
    #allocation2 [shape = 'u8[1536]{0}', space=vmem, size = 0x800, scoped, tag = 'input window, operand 3, single buffered']
    #allocation3 [shape = 's32[1]{0}', space=sflag, size = 0x4, scoped, tag = 'scoped memory for tpu_custom_call.1']
    #allocation4 [shape = 's32[1]{0}', space=sflag, size = 0x4, scoped, tag = 'scoped memory for tpu_custom_call.1']
    #allocation5 [shape = 'u8[12288]{0}', space=vmem, size = 0x3000, scoped, tag = 'output window, operand 0, single buffered']
    %21 = vsyncpa [#allocation3], 0
    %22 = vsyncpa [#allocation4], 0
    // Predicated region
    $region2: #{tpu_custom_call.1} parent=1 // pred_check
      _
    $region3: #{tpu_custom_call.1} parent=1 // pred_check_branch
      %24 = sbr.rel (0) target = $region5
    $region4: #{tpu_custom_call.1} parent=1 // pred_region
      _
    $region5: #{tpu_custom_call.1} parent=1 // pred_fallthru
      _
    // Predicated region
    $region6: #{tpu_custom_call.1} parent=1 // pred_check
      _
    $region7: #{tpu_custom_call.1} parent=1 // pred_check_branch
      %26 = sbr.rel (0) target = $region9
    $region8: #{tpu_custom_call.1} parent=1 // pred_region
      _
    $region9: #{tpu_custom_call.1} parent=1 // pred_fallthru
      _
    // Predicated region
    $region10: #{tpu_custom_call.1} parent=1 // pred_check
      _
    $region11: #{tpu_custom_call.1} parent=1 // pred_check_branch
      %28 = sbr.rel (0) target = $region13
    $region12: #{tpu_custom_call.1} parent=1 // pred_region
      _
    $region13: #{tpu_custom_call.1} parent=1 // pred_fallthru
      _
    // Predicated region
    $region14: #{tpu_custom_call.1} parent=1 // pred_check
      _
    $region15: #{tpu_custom_call.1} parent=1 // pred_check_branch
      %30 = sbr.rel (0) target = $region17
    $region16: #{tpu_custom_call.1} parent=1 // pred_region
      %s32 = ssub.s32 48, 48
      %33 = vsyncadd [#allocation3], %s32
      %s34 = sshll.u32 [#allocation2], 4
      %s35 = int_to_ptr.vmem [resolvable:$true] %s34
      %40 = dma.hbm_to_vmem [thread:$0]  %s3, 48, %s35, [#allocation3], 16, 16, 1
    $region17: #{tpu_custom_call.1} parent=1 // pred_fallthru
      _
    // Predicated region
    $region18: #{tpu_custom_call.1} parent=1 // pred_check
      _
    $region19: #{tpu_custom_call.1} parent=1 // pred_check_branch
      %42 = sbr.rel (0) target = $region21
    $region20: #{tpu_custom_call.1} parent=1 // pred_region
      _
    $region21: #{tpu_custom_call.1} parent=1 // pred_fallthru
      _
    // Predicated region
    $region22: #{tpu_custom_call.1} parent=1 // pred_check
      _
    $region23: #{tpu_custom_call.1} parent=1 // pred_check_branch
      %44 = sbr.rel (0) target = $region25
    $region24: #{tpu_custom_call.1} parent=1 // pred_region
      _
    $region25: #{tpu_custom_call.1} parent=1 // pred_fallthru
      _
    // Predicated region
    $region26: #{tpu_custom_call.1} parent=1 // pred_check
      _
    $region27: #{tpu_custom_call.1} parent=1 // pred_check_branch
      %46 = sbr.rel (0) target = $region29
    $region28: #{tpu_custom_call.1} parent=1 // pred_region
      _
    $region29: #{tpu_custom_call.1} parent=1 // pred_fallthru
      _
    // Predicated region
    $region30: #{tpu_custom_call.1} parent=1 // pred_check
      _
    $region31: #{tpu_custom_call.1} parent=1 // pred_check_branch
      %48 = sbr.rel (0) target = $region33
    $region32: #{tpu_custom_call.1} parent=1 // pred_region
      _
    $region33: #{tpu_custom_call.1} parent=1 // pred_fallthru
      _
    // Predicated region
    $region34: #{tpu_custom_call.1} parent=1 // pred_check
      _
    $region35: #{tpu_custom_call.1} parent=1 // pred_check_branch
      %50 = sbr.rel (0) target = $region37
    $region36: #{tpu_custom_call.1} parent=1 // pred_region
      _
    $region37: #{tpu_custom_call.1} parent=1 // pred_fallthru
      _
    // Predicated region
    $region38: #{tpu_custom_call.1} parent=1 // pred_check
      _
    $region39: #{tpu_custom_call.1} parent=1 // pred_check_branch
      %52 = sbr.rel (0) target = $region41
    $region40: #{tpu_custom_call.1} parent=1 // pred_region
      _
    $region41: #{tpu_custom_call.1} parent=1 // pred_fallthru
      _
    // Predicated region
    $region42: #{tpu_custom_call.1} parent=1 // pred_check
      _
    $region43: #{tpu_custom_call.1} parent=1 // pred_check_branch
      %54 = sbr.rel (0) target = $region45
    $region44: #{tpu_custom_call.1} parent=1 // pred_region
      _
    $region45: #{tpu_custom_call.1} parent=1 // pred_fallthru
      _
    // Predicated region
    $region46: #{tpu_custom_call.1} parent=1 // pred_check
      _
    $region47: #{tpu_custom_call.1} parent=1 // pred_check_branch
      %56 = sbr.rel (0) target = $region49
    $region48: #{tpu_custom_call.1} parent=1 // pred_region
      _
    $region49: #{tpu_custom_call.1} parent=1 // pred_fallthru
      _
    // Predicated region
    $region50: #{tpu_custom_call.1} parent=1 // pred_check
      _
    $region51: #{tpu_custom_call.1} parent=1 // pred_check_branch
      %58 = sbr.rel (0) target = $region53
    $region52: #{tpu_custom_call.1} parent=1 // pred_region
      _
    $region53: #{tpu_custom_call.1} parent=1 // pred_fallthru
      _
    // Predicated region
    $region54: #{tpu_custom_call.1} parent=1 // pred_check
      _
    $region55: #{tpu_custom_call.1} parent=1 // pred_check_branch
      %60 = sbr.rel (0) target = $region57
    $region56: #{tpu_custom_call.1} parent=1 // pred_region
      _
    $region57: #{tpu_custom_call.1} parent=1 // pred_fallthru
      _
    // Predicated region
    $region58: #{tpu_custom_call.1} parent=1 // pred_check
      _
    $region59: #{tpu_custom_call.1} parent=1 // pred_check_branch
      %62 = sbr.rel (0) target = $region61
    $region60: #{tpu_custom_call.1} parent=1 // pred_region
      _
    $region61: #{tpu_custom_call.1} parent=1 // pred_fallthru
      _
    // Predicated region
    $region62: #{tpu_custom_call.1} parent=1 // pred_check
      _
    $region63: #{tpu_custom_call.1} parent=1 // pred_check_branch
      %64 = sbr.rel (0) target = $region65
    $region64: #{tpu_custom_call.1} parent=1 // pred_region
      _
    $region65: #{tpu_custom_call.1} parent=1 // pred_fallthru
      _
    // Predicated region
    $region66: #{tpu_custom_call.1} parent=1 // pred_check
      _
    $region67: #{tpu_custom_call.1} parent=1 // pred_check_branch
      %66 = sbr.rel (0) target = $region69
    $region68: #{tpu_custom_call.1} parent=1 // pred_region
      %67 = dma.done [#allocation3], 48
    $region69: #{tpu_custom_call.1} parent=1 // pred_fallthru
      _
    %v68 = vld [vmem:[%s0] sm:$0xff]
    %v69 = vld [vmem:[%s4] sm:$0xff]
    %v70 = vld [vmem:[%s4 + $0x8] sm:$0xff]
    %v71 = vld [vmem:[%s5] sm:$0x1]
    %v73 = vlaneseq
    %v74 = vshrl.u32 %v73, 7
    %v75 = vsub.s32 0, %v74
    %v76 = vrot.slane %v71, %v75
    %vm78 = vcmask 130048
    %v80 = vsel %vm78, %v68, 0
    %82 = vmatprep.subr.mxu0 0.0
    %83 = vmatpush1.msra.mxu0 %v69
    %84 = vmatprep.subr.mxu0 0.0
    %85 = vmatpush1.msra.mxu0 %v70
    %86 = vmatprep.subr.mxu0 0.0
    %87 = vmatpush1.msra.mxu0 0.0
    %88 = vmatprep.subr.mxu0 0.0
    %89 = vmatpush1.msra.mxu0 0.0
    %90 = vmatprep.subr.mxu0 0.0
    %91 = vmatpush1.msra.mxu0 0.0
    %92 = vmatprep.subr.mxu0 0.0
    %93 = vmatpush1.msra.mxu0 0.0
    %94 = vmatprep.subr.mxu0 0.0
    %95 = vmatpush1.msra.mxu0 0.0
    %96 = vmatprep.subr.mxu0 0.0
    %97 = vmatpush1.msra.mxu0 0.0
    %98 = vmatprep.subr.mxu0 0.0
    %99 = vmatpush1.msra.mxu0 0.0
    %100 = vmatprep.subr.mxu0 0.0
    %101 = vmatpush1.msra.mxu0 0.0
    %102 = vmatprep.subr.mxu0 0.0
    %103 = vmatpush1.msra.mxu0 0.0
    %104 = vmatprep.subr.mxu0 0.0
    %105 = vmatpush1.msra.mxu0 0.0
    %106 = vmatprep.subr.mxu0 0.0
    %107 = vmatpush1.msra.mxu0 0.0
    %108 = vmatprep.subr.mxu0 0.0
    %109 = vmatpush1.msra.mxu0 0.0
    %110 = vmatprep.subr.mxu0 0.0
    %111 = vmatpush1.msra.mxu0 0.0
    %112 = vmatprep.subr.mxu0 0.0
    %113 = vmatpush1.msra.mxu0 0.0
    %114 = vmatprep.subr.mxu0 0.0
    %115 = vmatpush1.msra.mxu0 0.0
    %116 = vmatprep.subr.mxu0 0.0
    %117 = vmatpush1.msra.mxu0 0.0
    %118 = vmatprep.subr.mxu0 0.0
    %119 = vmatpush1.msra.mxu0 0.0
    %120 = vmatprep.subr.mxu0 0.0
    %121 = vmatpush1.msra.mxu0 0.0
    %122 = vmatprep.subr.mxu0 0.0
    %123 = vmatpush1.msra.mxu0 0.0
    %124 = vmatprep.subr.mxu0 0.0
    %125 = vmatpush1.msra.mxu0 0.0
    %126 = vmatprep.subr.mxu0 0.0
    %127 = vmatpush1.msra.mxu0 0.0
    %128 = vmatprep.subr.mxu0 0.0
    %129 = vmatpush1.msra.mxu0 0.0
    %130 = vmatprep.subr.mxu0 0.0
    %131 = vmatpush1.msra.mxu0 0.0
    %132 = vmatprep.subr.mxu0 0.0
    %133 = vmatpush1.msra.mxu0 0.0
    %134 = vmatprep.subr.mxu0 0.0
    %135 = vmatpush1.msra.mxu0 0.0
    %136 = vmatprep.subr.mxu0 0.0
    %137 = vmatpush1.msra.mxu0 0.0
    %138 = vmatprep.subr.mxu0 0.0
    %139 = vmatpush1.msra.mxu0 0.0
    %140 = vmatprep.subr.mxu0 0.0
    %141 = vmatpush1.msra.mxu0 0.0
    %142 = vmatprep.subr.mxu0 0.0
    %143 = vmatpush1.msra.mxu0 0.0
    %144 = vmatprep.subr.mxu0 0.0
    %145 = vmatpush1.msra.mxu0 0.0
    %146 = vmatprep.mubr.f32.mxu0 0.0
    %147 = vmatmul.mubr.f32.gmra.mrb[0].mxu0 %v80
    %v148 = vpop.f32.mrb[0].mxu0
    %v149 = vadd.f32 %v76, %v148
    %v150 = vpop.f32.mrb[0].mxu0
    %151 = vdwg.mxu0
    %v152 = vmax.f32 %v149, 0.0
    %v153 = vld [vmem:[%s6] sm:$0xff]
    %v154 = vld [vmem:[%s6 + $0x8] sm:$0xff]
    %v155 = vld [vmem:[%s6 + $0x10] sm:$0xff]
    %v156 = vld [vmem:[%s6 + $0x18] sm:$0xff]
    %v157 = vld [vmem:[%s7] sm:$0x1]
    %v159 = vlaneseq
    %v160 = vshrl.u32 %v159, 7
    %v161 = vsub.s32 0, %v160
    %v162 = vrot.slane %v157, %v161
    %vm164 = vcmask 261120
    %v166 = vsel %vm164, %v152, 0
    %168 = vmatprep.subr.mxu0 0.0
    %169 = vmatpush1.msra.mxu0 %v153
    %170 = vmatprep.subr.mxu0 0.0
    %171 = vmatpush1.msra.mxu0 %v154
    %172 = vmatprep.subr.mxu0 0.0
    %173 = vmatpush1.msra.mxu0 %v155
    %174 = vmatprep.subr.mxu0 0.0
    %175 = vmatpush1.msra.mxu0 %v156
    %176 = vmatprep.subr.mxu0 0.0
    %177 = vmatpush1.msra.mxu0 0.0
    %178 = vmatprep.subr.mxu0 0.0
    %179 = vmatpush1.msra.mxu0 0.0
    %180 = vmatprep.subr.mxu0 0.0
    %181 = vmatpush1.msra.mxu0 0.0
    %182 = vmatprep.subr.mxu0 0.0
    %183 = vmatpush1.msra.mxu0 0.0
    %184 = vmatprep.subr.mxu0 0.0
    %185 = vmatpush1.msra.mxu0 0.0
    %186 = vmatprep.subr.mxu0 0.0
    %187 = vmatpush1.msra.mxu0 0.0
    %188 = vmatprep.subr.mxu0 0.0
    %189 = vmatpush1.msra.mxu0 0.0
    %190 = vmatprep.subr.mxu0 0.0
    %191 = vmatpush1.msra.mxu0 0.0
    %192 = vmatprep.subr.mxu0 0.0
    %193 = vmatpush1.msra.mxu0 0.0
    %194 = vmatprep.subr.mxu0 0.0
    %195 = vmatpush1.msra.mxu0 0.0
    %196 = vmatprep.subr.mxu0 0.0
    %197 = vmatpush1.msra.mxu0 0.0
    %198 = vmatprep.subr.mxu0 0.0
    %199 = vmatpush1.msra.mxu0 0.0
    %200 = vmatprep.subr.mxu0 0.0
    %201 = vmatpush1.msra.mxu0 0.0
    %202 = vmatprep.subr.mxu0 0.0
    %203 = vmatpush1.msra.mxu0 0.0
    %204 = vmatprep.subr.mxu0 0.0
    %205 = vmatpush1.msra.mxu0 0.0
    %206 = vmatprep.subr.mxu0 0.0
    %207 = vmatpush1.msra.mxu0 0.0
    %208 = vmatprep.subr.mxu0 0.0
    %209 = vmatpush1.msra.mxu0 0.0
    %210 = vmatprep.subr.mxu0 0.0
    %211 = vmatpush1.msra.mxu0 0.0
    %212 = vmatprep.subr.mxu0 0.0
    %213 = vmatpush1.msra.mxu0 0.0
    %214 = vmatprep.subr.mxu0 0.0
    %215 = vmatpush1.msra.mxu0 0.0
    %216 = vmatprep.subr.mxu0 0.0
    %217 = vmatpush1.msra.mxu0 0.0
    %218 = vmatprep.subr.mxu0 0.0
    %219 = vmatpush1.msra.mxu0 0.0
    %220 = vmatprep.subr.mxu0 0.0
    %221 = vmatpush1.msra.mxu0 0.0
    %222 = vmatprep.subr.mxu0 0.0
    %223 = vmatpush1.msra.mxu0 0.0
    %224 = vmatprep.subr.mxu0 0.0
    %225 = vmatpush1.msra.mxu0 0.0
    %226 = vmatprep.subr.mxu0 0.0
    %227 = vmatpush1.msra.mxu0 0.0
    %228 = vmatprep.subr.mxu0 0.0
    %229 = vmatpush1.msra.mxu0 0.0
    %230 = vmatprep.subr.mxu0 0.0
    %231 = vmatpush1.msra.mxu0 0.0
    %232 = vmatprep.mubr.f32.mxu0 0.0
    %233 = vmatmul.mubr.f32.gmra.mrb[0].mxu0 %v166
    %v234 = vpop.f32.mrb[0].mxu0
    %v235 = vadd.f32 %v162, %v234
    %v236 = vpop.f32.mrb[0].mxu0
    %237 = vdwg.mxu0
    %v238 = vmax.f32 %v235, 0.0
    %v239 = vld [vmem:[%s8] sm:$0xff]
    %v240 = vld [vmem:[%s8 + $0x8] sm:$0xff]
    %v241 = vld [vmem:[%s8 + $0x10] sm:$0xff]
    %v242 = vld [vmem:[%s8 + $0x18] sm:$0xff]
    %v243 = vld [vmem:[%s9] sm:$0x1]
    %v245 = vlaneseq
    %v246 = vshrl.u32 %v245, 7
    %v247 = vsub.s32 0, %v246
    %v248 = vrot.slane %v243, %v247
    %v251 = vsel %vm164, %v238, 0
    %253 = vmatprep.subr.mxu0 0.0
    %254 = vmatpush1.msra.mxu0 %v239
    %255 = vmatprep.subr.mxu0 0.0
    %256 = vmatpush1.msra.mxu0 %v240
    %257 = vmatprep.subr.mxu0 0.0
    %258 = vmatpush1.msra.mxu0 %v241
    %259 = vmatprep.subr.mxu0 0.0
    %260 = vmatpush1.msra.mxu0 %v242
    %261 = vmatprep.subr.mxu0 0.0
    %262 = vmatpush1.msra.mxu0 0.0
    %263 = vmatprep.subr.mxu0 0.0
    %264 = vmatpush1.msra.mxu0 0.0
    %265 = vmatprep.subr.mxu0 0.0
    %266 = vmatpush1.msra.mxu0 0.0
    %267 = vmatprep.subr.mxu0 0.0
    %268 = vmatpush1.msra.mxu0 0.0
    %269 = vmatprep.subr.mxu0 0.0
    %270 = vmatpush1.msra.mxu0 0.0
    %271 = vmatprep.subr.mxu0 0.0
    %272 = vmatpush1.msra.mxu0 0.0
    %273 = vmatprep.subr.mxu0 0.0
    %274 = vmatpush1.msra.mxu0 0.0
    %275 = vmatprep.subr.mxu0 0.0
    %276 = vmatpush1.msra.mxu0 0.0
    %277 = vmatprep.subr.mxu0 0.0
    %278 = vmatpush1.msra.mxu0 0.0
    %279 = vmatprep.subr.mxu0 0.0
    %280 = vmatpush1.msra.mxu0 0.0
    %281 = vmatprep.subr.mxu0 0.0
    %282 = vmatpush1.msra.mxu0 0.0
    %283 = vmatprep.subr.mxu0 0.0
    %284 = vmatpush1.msra.mxu0 0.0
    %285 = vmatprep.subr.mxu0 0.0
    %286 = vmatpush1.msra.mxu0 0.0
    %287 = vmatprep.subr.mxu0 0.0
    %288 = vmatpush1.msra.mxu0 0.0
    %289 = vmatprep.subr.mxu0 0.0
    %290 = vmatpush1.msra.mxu0 0.0
    %291 = vmatprep.subr.mxu0 0.0
    %292 = vmatpush1.msra.mxu0 0.0
    %293 = vmatprep.subr.mxu0 0.0
    %294 = vmatpush1.msra.mxu0 0.0
    %295 = vmatprep.subr.mxu0 0.0
    %296 = vmatpush1.msra.mxu0 0.0
    %297 = vmatprep.subr.mxu0 0.0
    %298 = vmatpush1.msra.mxu0 0.0
    %299 = vmatprep.subr.mxu0 0.0
    %300 = vmatpush1.msra.mxu0 0.0
    %301 = vmatprep.subr.mxu0 0.0
    %302 = vmatpush1.msra.mxu0 0.0
    %303 = vmatprep.subr.mxu0 0.0
    %304 = vmatpush1.msra.mxu0 0.0
    %305 = vmatprep.subr.mxu0 0.0
    %306 = vmatpush1.msra.mxu0 0.0
    %307 = vmatprep.subr.mxu0 0.0
    %308 = vmatpush1.msra.mxu0 0.0
    %309 = vmatprep.subr.mxu0 0.0
    %310 = vmatpush1.msra.mxu0 0.0
    %311 = vmatprep.subr.mxu0 0.0
    %312 = vmatpush1.msra.mxu0 0.0
    %313 = vmatprep.subr.mxu0 0.0
    %314 = vmatpush1.msra.mxu0 0.0
    %315 = vmatprep.subr.mxu0 0.0
    %316 = vmatpush1.msra.mxu0 0.0
    %317 = vmatprep.mubr.f32.mxu0 0.0
    %318 = vmatmul.mubr.f32.gmra.mrb[0].mxu0 %v251
    %v319 = vpop.f32.mrb[0].mxu0
    %v320 = vadd.f32 %v248, %v319
    %v321 = vpop.f32.mrb[0].mxu0
    %322 = vdwg.mxu0
    %v323 = vld [vmem:[%s1] sm:$0xff]
    %v324 = vld [vmem:[%s10] sm:$0xff]
    %v325 = vld [vmem:[%s10 + $0x8] sm:$0xf]
    %v326 = vld [vmem:[%s11] sm:$0x1]
    %v328 = vlaneseq
    %v329 = vshrl.u32 %v328, 7
    %v330 = vsub.s32 0, %v329
    %v331 = vrot.slane %v326, %v330
    %vm333 = vcmask 97280
    %v335 = vsel %vm333, %v323, 0
    %vm337 = vcmask 1043456
    %v339 = vsel %vm337, %v325, 0
    %341 = vmatprep.subr.mxu0 0.0
    %342 = vmatpush1.msra.mxu0 %v324
    %343 = vmatprep.subr.mxu0 0.0
    %344 = vmatpush1.msra.mxu0 %v339
    %345 = vmatprep.subr.mxu0 0.0
    %346 = vmatpush1.msra.mxu0 0.0
    %347 = vmatprep.subr.mxu0 0.0
    %348 = vmatpush1.msra.mxu0 0.0
    %349 = vmatprep.subr.mxu0 0.0
    %350 = vmatpush1.msra.mxu0 0.0
    %351 = vmatprep.subr.mxu0 0.0
    %352 = vmatpush1.msra.mxu0 0.0
    %353 = vmatprep.subr.mxu0 0.0
    %354 = vmatpush1.msra.mxu0 0.0
    %355 = vmatprep.subr.mxu0 0.0
    %356 = vmatpush1.msra.mxu0 0.0
    %357 = vmatprep.subr.mxu0 0.0
    %358 = vmatpush1.msra.mxu0 0.0
    %359 = vmatprep.subr.mxu0 0.0
    %360 = vmatpush1.msra.mxu0 0.0
    %361 = vmatprep.subr.mxu0 0.0
    %362 = vmatpush1.msra.mxu0 0.0
    %363 = vmatprep.subr.mxu0 0.0
    %364 = vmatpush1.msra.mxu0 0.0
    %365 = vmatprep.subr.mxu0 0.0
    %366 = vmatpush1.msra.mxu0 0.0
    %367 = vmatprep.subr.mxu0 0.0
    %368 = vmatpush1.msra.mxu0 0.0
    %369 = vmatprep.subr.mxu0 0.0
    %370 = vmatpush1.msra.mxu0 0.0
    %371 = vmatprep.subr.mxu0 0.0
    %372 = vmatpush1.msra.mxu0 0.0
    %373 = vmatprep.subr.mxu0 0.0
    %374 = vmatpush1.msra.mxu0 0.0
    %375 = vmatprep.subr.mxu0 0.0
    %376 = vmatpush1.msra.mxu0 0.0
    %377 = vmatprep.subr.mxu0 0.0
    %378 = vmatpush1.msra.mxu0 0.0
    %379 = vmatprep.subr.mxu0 0.0
    %380 = vmatpush1.msra.mxu0 0.0
    %381 = vmatprep.subr.mxu0 0.0
    %382 = vmatpush1.msra.mxu0 0.0
    %383 = vmatprep.subr.mxu0 0.0
    %384 = vmatpush1.msra.mxu0 0.0
    %385 = vmatprep.subr.mxu0 0.0
    %386 = vmatpush1.msra.mxu0 0.0
    %387 = vmatprep.subr.mxu0 0.0
    %388 = vmatpush1.msra.mxu0 0.0
    %389 = vmatprep.subr.mxu0 0.0
    %390 = vmatpush1.msra.mxu0 0.0
    %391 = vmatprep.subr.mxu0 0.0
    %392 = vmatpush1.msra.mxu0 0.0
    %393 = vmatprep.subr.mxu0 0.0
    %394 = vmatpush1.msra.mxu0 0.0
    %395 = vmatprep.subr.mxu0 0.0
    %396 = vmatpush1.msra.mxu0 0.0
    %397 = vmatprep.subr.mxu0 0.0
    %398 = vmatpush1.msra.mxu0 0.0
    %399 = vmatprep.subr.mxu0 0.0
    %400 = vmatpush1.msra.mxu0 0.0
    %401 = vmatprep.subr.mxu0 0.0
    %402 = vmatpush1.msra.mxu0 0.0
    %403 = vmatprep.subr.mxu0 0.0
    %404 = vmatpush1.msra.mxu0 0.0
    %405 = vmatprep.mubr.f32.mxu0 0.0
    %406 = vmatmul.mubr.f32.gmra.mrb[0].mxu0 %v335
    %v407 = vpop.f32.mrb[0].mxu0
    %v408 = vadd.f32 %v331, %v407
    %v409 = vpop.f32.mrb[0].mxu0
    %410 = vdwg.mxu0
    %v411 = vmax.f32 %v408, 0.0
    %v412 = vld [vmem:[%s12] sm:$0xff]
    %v413 = vld [vmem:[%s12 + $0x8] sm:$0xff]
    %v414 = vld [vmem:[%s12 + $0x10] sm:$0xff]
    %v415 = vld [vmem:[%s12 + $0x18] sm:$0xff]
    %v416 = vld [vmem:[%s13] sm:$0x1]
    %v418 = vlaneseq
    %v419 = vshrl.u32 %v418, 7
    %v420 = vsub.s32 0, %v419
    %v421 = vrot.slane %v416, %v420
    %v424 = vsel %vm164, %v411, 0
    %426 = vmatprep.subr.mxu0 0.0
    %427 = vmatpush1.msra.mxu0 %v412
    %428 = vmatprep.subr.mxu0 0.0
    %429 = vmatpush1.msra.mxu0 %v413
    %430 = vmatprep.subr.mxu0 0.0
    %431 = vmatpush1.msra.mxu0 %v414
    %432 = vmatprep.subr.mxu0 0.0
    %433 = vmatpush1.msra.mxu0 %v415
    %434 = vmatprep.subr.mxu0 0.0
    %435 = vmatpush1.msra.mxu0 0.0
    %436 = vmatprep.subr.mxu0 0.0
    %437 = vmatpush1.msra.mxu0 0.0
    %438 = vmatprep.subr.mxu0 0.0
    %439 = vmatpush1.msra.mxu0 0.0
    %440 = vmatprep.subr.mxu0 0.0
    %441 = vmatpush1.msra.mxu0 0.0
    %442 = vmatprep.subr.mxu0 0.0
    %443 = vmatpush1.msra.mxu0 0.0
    %444 = vmatprep.subr.mxu0 0.0
    %445 = vmatpush1.msra.mxu0 0.0
    %446 = vmatprep.subr.mxu0 0.0
    %447 = vmatpush1.msra.mxu0 0.0
    %448 = vmatprep.subr.mxu0 0.0
    %449 = vmatpush1.msra.mxu0 0.0
    %450 = vmatprep.subr.mxu0 0.0
    %451 = vmatpush1.msra.mxu0 0.0
    %452 = vmatprep.subr.mxu0 0.0
    %453 = vmatpush1.msra.mxu0 0.0
    %454 = vmatprep.subr.mxu0 0.0
    %455 = vmatpush1.msra.mxu0 0.0
    %456 = vmatprep.subr.mxu0 0.0
    %457 = vmatpush1.msra.mxu0 0.0
    %458 = vmatprep.subr.mxu0 0.0
    %459 = vmatpush1.msra.mxu0 0.0
    %460 = vmatprep.subr.mxu0 0.0
    %461 = vmatpush1.msra.mxu0 0.0
    %462 = vmatprep.subr.mxu0 0.0
    %463 = vmatpush1.msra.mxu0 0.0
    %464 = vmatprep.subr.mxu0 0.0
    %465 = vmatpush1.msra.mxu0 0.0
    %466 = vmatprep.subr.mxu0 0.0
    %467 = vmatpush1.msra.mxu0 0.0
    %468 = vmatprep.subr.mxu0 0.0
    %469 = vmatpush1.msra.mxu0 0.0
    %470 = vmatprep.subr.mxu0 0.0
    %471 = vmatpush1.msra.mxu0 0.0
    %472 = vmatprep.subr.mxu0 0.0
    %473 = vmatpush1.msra.mxu0 0.0
    %474 = vmatprep.subr.mxu0 0.0
    %475 = vmatpush1.msra.mxu0 0.0
    %476 = vmatprep.subr.mxu0 0.0
    %477 = vmatpush1.msra.mxu0 0.0
    %478 = vmatprep.subr.mxu0 0.0
    %479 = vmatpush1.msra.mxu0 0.0
    %480 = vmatprep.subr.mxu0 0.0
    %481 = vmatpush1.msra.mxu0 0.0
    %482 = vmatprep.subr.mxu0 0.0
    %483 = vmatpush1.msra.mxu0 0.0
    %484 = vmatprep.subr.mxu0 0.0
    %485 = vmatpush1.msra.mxu0 0.0
    %486 = vmatprep.subr.mxu0 0.0
    %487 = vmatpush1.msra.mxu0 0.0
    %488 = vmatprep.subr.mxu0 0.0
    %489 = vmatpush1.msra.mxu0 0.0
    %490 = vmatprep.mubr.f32.mxu0 0.0
    %491 = vmatmul.mubr.f32.gmra.mrb[0].mxu0 %v424
    %v492 = vpop.f32.mrb[0].mxu0
    %v493 = vadd.f32 %v421, %v492
    %v494 = vpop.f32.mrb[0].mxu0
    %495 = vdwg.mxu0
    %v496 = vmax.f32 %v493, 0.0
    %v497 = vld [vmem:[%s14] sm:$0xff]
    %v498 = vld [vmem:[%s14 + $0x8] sm:$0xff]
    %v499 = vld [vmem:[%s14 + $0x10] sm:$0xff]
    %v500 = vld [vmem:[%s14 + $0x18] sm:$0xff]
    %v501 = vld [vmem:[%s15] sm:$0x1]
    %v503 = vlaneseq
    %v504 = vshrl.u32 %v503, 7
    %v505 = vsub.s32 0, %v504
    %v506 = vrot.slane %v501, %v505
    %v509 = vsel %vm164, %v496, 0
    %511 = vmatprep.subr.mxu0 0.0
    %512 = vmatpush1.msra.mxu0 %v497
    %513 = vmatprep.subr.mxu0 0.0
    %514 = vmatpush1.msra.mxu0 %v498
    %515 = vmatprep.subr.mxu0 0.0
    %516 = vmatpush1.msra.mxu0 %v499
    %517 = vmatprep.subr.mxu0 0.0
    %518 = vmatpush1.msra.mxu0 %v500
    %519 = vmatprep.subr.mxu0 0.0
    %520 = vmatpush1.msra.mxu0 0.0
    %521 = vmatprep.subr.mxu0 0.0
    %522 = vmatpush1.msra.mxu0 0.0
    %523 = vmatprep.subr.mxu0 0.0
    %524 = vmatpush1.msra.mxu0 0.0
    %525 = vmatprep.subr.mxu0 0.0
    %526 = vmatpush1.msra.mxu0 0.0
    %527 = vmatprep.subr.mxu0 0.0
    %528 = vmatpush1.msra.mxu0 0.0
    %529 = vmatprep.subr.mxu0 0.0
    %530 = vmatpush1.msra.mxu0 0.0
    %531 = vmatprep.subr.mxu0 0.0
    %532 = vmatpush1.msra.mxu0 0.0
    %533 = vmatprep.subr.mxu0 0.0
    %534 = vmatpush1.msra.mxu0 0.0
    %535 = vmatprep.subr.mxu0 0.0
    %536 = vmatpush1.msra.mxu0 0.0
    %537 = vmatprep.subr.mxu0 0.0
    %538 = vmatpush1.msra.mxu0 0.0
    %539 = vmatprep.subr.mxu0 0.0
    %540 = vmatpush1.msra.mxu0 0.0
    %541 = vmatprep.subr.mxu0 0.0
    %542 = vmatpush1.msra.mxu0 0.0
    %543 = vmatprep.subr.mxu0 0.0
    %544 = vmatpush1.msra.mxu0 0.0
    %545 = vmatprep.subr.mxu0 0.0
    %546 = vmatpush1.msra.mxu0 0.0
    %547 = vmatprep.subr.mxu0 0.0
    %548 = vmatpush1.msra.mxu0 0.0
    %549 = vmatprep.subr.mxu0 0.0
    %550 = vmatpush1.msra.mxu0 0.0
    %551 = vmatprep.subr.mxu0 0.0
    %552 = vmatpush1.msra.mxu0 0.0
    %553 = vmatprep.subr.mxu0 0.0
    %554 = vmatpush1.msra.mxu0 0.0
    %555 = vmatprep.subr.mxu0 0.0
    %556 = vmatpush1.msra.mxu0 0.0
    %557 = vmatprep.subr.mxu0 0.0
    %558 = vmatpush1.msra.mxu0 0.0
    %559 = vmatprep.subr.mxu0 0.0
    %560 = vmatpush1.msra.mxu0 0.0
    %561 = vmatprep.subr.mxu0 0.0
    %562 = vmatpush1.msra.mxu0 0.0
    %563 = vmatprep.subr.mxu0 0.0
    %564 = vmatpush1.msra.mxu0 0.0
    %565 = vmatprep.subr.mxu0 0.0
    %566 = vmatpush1.msra.mxu0 0.0
    %567 = vmatprep.subr.mxu0 0.0
    %568 = vmatpush1.msra.mxu0 0.0
    %569 = vmatprep.subr.mxu0 0.0
    %570 = vmatpush1.msra.mxu0 0.0
    %571 = vmatprep.subr.mxu0 0.0
    %572 = vmatpush1.msra.mxu0 0.0
    %573 = vmatprep.subr.mxu0 0.0
    %574 = vmatpush1.msra.mxu0 0.0
    %575 = vmatprep.mubr.f32.mxu0 0.0
    %576 = vmatmul.mubr.f32.gmra.mrb[0].mxu0 %v509
    %v577 = vpop.f32.mrb[0].mxu0
    %v578 = vadd.f32 %v506, %v577
    %v579 = vpop.f32.mrb[0].mxu0
    %580 = vdwg.mxu0
    %vm581 = vcmask 64512
    %v582 = vsel %vm581, %v320, 0.0
    %583 = vadd.xlane.f32.xlu0 %v582
    %v584 = vpop.xlane.xlu0 %583
    %v585 = vrcp.pop 8.0
    %v586 = vmul.f32 %v584, %v585
    %v587 = vsub.f32 %v320, %v586
    %v588 = vmul.f32 %v587, %v587
    %v589 = vsel %vm581, %v588, 0.0
    %590 = vadd.xlane.f32.xlu0 %v589
    %v591 = vpop.xlane.xlu0 %590
    %v592 = vrcp.pop 7.0
    %v593 = vmul.f32 %v591, %v592
    %v594 = vadd.f32 %v593, 1e-08
    %v595 = vrsqrt.pop %v594
    %v596 = vmul.f32 %v594, %v595
    %vm597 = vcmp.eq.f32.partialorder %v594, inf
    %v598 = vsel %vm597, %v594, %v596
    %vm599 = vcmp.eq.f32.partialorder %v594, 0.0
    %v600 = vand.u32 %v594, 2147483648
    %v601 = vsel %vm599, %v600, %v598
    %v602 = vrcp.pop %v601
    %v603 = vmul.f32 %v587, %v602
    %v604 = vsel %vm581, %v578, 0.0
    %605 = vadd.xlane.f32.xlu0 %v604
    %v606 = vpop.xlane.xlu0 %605
    %v607 = vmul.f32 %v606, %v585
    %v608 = vsub.f32 %v578, %v607
    %v609 = vmul.f32 %v608, %v608
    %v610 = vsel %vm581, %v609, 0.0
    %611 = vadd.xlane.f32.xlu0 %v610
    %v612 = vpop.xlane.xlu0 %611
    %v613 = vmul.f32 %v612, %v592
    %v614 = vadd.f32 %v613, 1e-08
    %v615 = vrsqrt.pop %v614
    %v616 = vmul.f32 %v614, %v615
    %vm617 = vcmp.eq.f32.partialorder %v614, inf
    %v618 = vsel %vm617, %v614, %v616
    %vm619 = vcmp.eq.f32.partialorder %v614, 0.0
    %v620 = vand.u32 %v614, 2147483648
    %v621 = vsel %vm619, %v620, %v618
    %v622 = vrcp.pop %v621
    %v623 = vmul.f32 %v608, %v622
    %v625 = vsel %vm581, %v603, 0
    %v628 = vsel %vm581, %v623, 0
    %630 = vmatprep.subr.mxu0 0.0
    %631 = vmatpush1.xpose.msra.mxu0 %v628
    %632 = vmatprep.subr.mxu0 0.0
    %633 = vmatpush1.xpose.msra.mxu0 0.0
    %634 = vmatprep.subr.mxu0 0.0
    %635 = vmatpush1.xpose.msra.mxu0 0.0
    %636 = vmatprep.subr.mxu0 0.0
    %637 = vmatpush1.xpose.msra.mxu0 0.0
    %638 = vmatprep.subr.mxu0 0.0
    %639 = vmatpush1.xpose.msra.mxu0 0.0
    %640 = vmatprep.subr.mxu0 0.0
    %641 = vmatpush1.xpose.msra.mxu0 0.0
    %642 = vmatprep.subr.mxu0 0.0
    %643 = vmatpush1.xpose.msra.mxu0 0.0
    %644 = vmatprep.subr.mxu0 0.0
    %645 = vmatpush1.xpose.msra.mxu0 0.0
    %646 = vmatprep.subr.mxu0 0.0
    %647 = vmatpush1.xpose.msra.mxu0 0.0
    %648 = vmatprep.subr.mxu0 0.0
    %649 = vmatpush1.xpose.msra.mxu0 0.0
    %650 = vmatprep.subr.mxu0 0.0
    %651 = vmatpush1.xpose.msra.mxu0 0.0
    %652 = vmatprep.subr.mxu0 0.0
    %653 = vmatpush1.xpose.msra.mxu0 0.0
    %654 = vmatprep.subr.mxu0 0.0
    %655 = vmatpush1.xpose.msra.mxu0 0.0
    %656 = vmatprep.subr.mxu0 0.0
    %657 = vmatpush1.xpose.msra.mxu0 0.0
    %658 = vmatprep.subr.mxu0 0.0
    %659 = vmatpush1.xpose.msra.mxu0 0.0
    %660 = vmatprep.subr.mxu0 0.0
    %661 = vmatpush1.xpose.msra.mxu0 0.0
    %662 = vmatprep.subr.mxu0 0.0
    %663 = vmatpush1.xpose.msra.mxu0 0.0
    %664 = vmatprep.subr.mxu0 0.0
    %665 = vmatpush1.xpose.msra.mxu0 0.0
    %666 = vmatprep.subr.mxu0 0.0
    %667 = vmatpush1.xpose.msra.mxu0 0.0
    %668 = vmatprep.subr.mxu0 0.0
    %669 = vmatpush1.xpose.msra.mxu0 0.0
    %670 = vmatprep.subr.mxu0 0.0
    %671 = vmatpush1.xpose.msra.mxu0 0.0
    %672 = vmatprep.subr.mxu0 0.0
    %673 = vmatpush1.xpose.msra.mxu0 0.0
    %674 = vmatprep.subr.mxu0 0.0
    %675 = vmatpush1.xpose.msra.mxu0 0.0
    %676 = vmatprep.subr.mxu0 0.0
    %677 = vmatpush1.xpose.msra.mxu0 0.0
    %678 = vmatprep.subr.mxu0 0.0
    %679 = vmatpush1.xpose.msra.mxu0 0.0
    %680 = vmatprep.subr.mxu0 0.0
    %681 = vmatpush1.xpose.msra.mxu0 0.0
    %682 = vmatprep.subr.mxu0 0.0
    %683 = vmatpush1.xpose.msra.mxu0 0.0
    %684 = vmatprep.subr.mxu0 0.0
    %685 = vmatpush1.xpose.msra.mxu0 0.0
    %686 = vmatprep.subr.mxu0 0.0
    %687 = vmatpush1.xpose.msra.mxu0 0.0
    %688 = vmatprep.subr.mxu0 0.0
    %689 = vmatpush1.xpose.msra.mxu0 0.0
    %690 = vmatprep.subr.mxu0 0.0
    %691 = vmatpush1.xpose.msra.mxu0 0.0
    %692 = vmatprep.subr.mxu0 0.0
    %693 = vmatpush1.xpose.msra.mxu0 0.0
    %694 = vmatprep.mubr.f32.mxu0 0.0
    %695 = vmatmul.mubr.f32.gmra.mrb[0].mxu0 %v625
    %v696 = vpop.f32.mrb[0].mxu0
    %v697 = vadd.f32 0.0, %v696
    %v698 = vpop.f32.mrb[0].mxu0
    %699 = vdwg.mxu0
    %v700 = vmul.f32 %v697, 0.35355338
    %v701 = vmul.f32 %v700, 1.442695
    %v702 = vpow.pop %v701
    %704 = vrot.lane.b32.xlu0 %v320, 120
    %v705 = vpop.permute.xlu0 %704
    %v707 = vsel %vm581, %v705, 0.0
    %708 = vadd.xlane.f32.xlu0 %v707
    %v709 = vpop.xlane.xlu0 %708
    %v710 = vmul.f32 %v709, %v585
    %v711 = vsub.f32 %v320, %v710
    %v712 = vmul.f32 %v711, %v711
    %714 = vrot.lane.b32.xlu0 %v712, 120
    %v715 = vpop.permute.xlu0 %714
    %v717 = vsel %vm581, %v715, 0.0
    %718 = vadd.xlane.f32.xlu0 %v717
    %v719 = vpop.xlane.xlu0 %718
    %v720 = vmul.f32 %v719, %v592
    %v721 = vadd.f32 %v720, 1e-08
    %v722 = vrsqrt.pop %v721
    %v723 = vmul.f32 %v721, %v722
    %vm724 = vcmp.eq.f32.partialorder %v721, inf
    %v725 = vsel %vm724, %v721, %v723
    %vm726 = vcmp.eq.f32.partialorder %v721, 0.0
    %v727 = vand.u32 %v721, 2147483648
    %v728 = vsel %vm726, %v727, %v725
    %v729 = vrcp.pop %v728
    %v730 = vmul.f32 %v711, %v729
    %732 = vrot.lane.b32.xlu0 %v578, 120
    %v733 = vpop.permute.xlu0 %732
    %v735 = vsel %vm581, %v733, 0.0
    %736 = vadd.xlane.f32.xlu0 %v735
    %v737 = vpop.xlane.xlu0 %736
    %v738 = vmul.f32 %v737, %v585
    %v739 = vsub.f32 %v578, %v738
    %v740 = vmul.f32 %v739, %v739
    %742 = vrot.lane.b32.xlu0 %v740, 120
    %v743 = vpop.permute.xlu0 %742
    %v745 = vsel %vm581, %v743, 0.0
    %746 = vadd.xlane.f32.xlu0 %v745
    %v747 = vpop.xlane.xlu0 %746
    %v748 = vmul.f32 %v747, %v592
    %v749 = vadd.f32 %v748, 1e-08
    %v750 = vrsqrt.pop %v749
    %v751 = vmul.f32 %v749, %v750
    %vm752 = vcmp.eq.f32.partialorder %v749, inf
    %v753 = vsel %vm752, %v749, %v751
    %vm754 = vcmp.eq.f32.partialorder %v749, 0.0
    %v755 = vand.u32 %v749, 2147483648
    %v756 = vsel %vm754, %v755, %v753
    %v757 = vrcp.pop %v756
    %v758 = vmul.f32 %v739, %v757
    %760 = vrot.lane.b32.xlu0 %v730, 120
    %v761 = vpop.permute.xlu0 %760
    %763 = vrot.lane.b32.xlu0 %v758, 120
    %v764 = vpop.permute.xlu0 %763
    %v765 = vsel %vm581, %v761, 0
    %v767 = vsel %vm581, %v764, 0
    %769 = vmatprep.subr.mxu0 0.0
    %770 = vmatpush1.xpose.msra.mxu0 %v767
    %771 = vmatprep.subr.mxu0 0.0
    %772 = vmatpush1.xpose.msra.mxu0 0.0
    %773 = vmatprep.subr.mxu0 0.0
    %774 = vmatpush1.xpose.msra.mxu0 0.0
    %775 = vmatprep.subr.mxu0 0.0
    %776 = vmatpush1.xpose.msra.mxu0 0.0
    %777 = vmatprep.subr.mxu0 0.0
    %778 = vmatpush1.xpose.msra.mxu0 0.0
    %779 = vmatprep.subr.mxu0 0.0
    %780 = vmatpush1.xpose.msra.mxu0 0.0
    %781 = vmatprep.subr.mxu0 0.0
    %782 = vmatpush1.xpose.msra.mxu0 0.0
    %783 = vmatprep.subr.mxu0 0.0
    %784 = vmatpush1.xpose.msra.mxu0 0.0
    %785 = vmatprep.subr.mxu0 0.0
    %786 = vmatpush1.xpose.msra.mxu0 0.0
    %787 = vmatprep.subr.mxu0 0.0
    %788 = vmatpush1.xpose.msra.mxu0 0.0
    %789 = vmatprep.subr.mxu0 0.0
    %790 = vmatpush1.xpose.msra.mxu0 0.0
    %791 = vmatprep.subr.mxu0 0.0
    %792 = vmatpush1.xpose.msra.mxu0 0.0
    %793 = vmatprep.subr.mxu0 0.0
    %794 = vmatpush1.xpose.msra.mxu0 0.0
    %795 = vmatprep.subr.mxu0 0.0
    %796 = vmatpush1.xpose.msra.mxu0 0.0
    %797 = vmatprep.subr.mxu0 0.0
    %798 = vmatpush1.xpose.msra.mxu0 0.0
    %799 = vmatprep.subr.mxu0 0.0
    %800 = vmatpush1.xpose.msra.mxu0 0.0
    %801 = vmatprep.subr.mxu0 0.0
    %802 = vmatpush1.xpose.msra.mxu0 0.0
    %803 = vmatprep.subr.mxu0 0.0
    %804 = vmatpush1.xpose.msra.mxu0 0.0
    %805 = vmatprep.subr.mxu0 0.0
    %806 = vmatpush1.xpose.msra.mxu0 0.0
    %807 = vmatprep.subr.mxu0 0.0
    %808 = vmatpush1.xpose.msra.mxu0 0.0
    %809 = vmatprep.subr.mxu0 0.0
    %810 = vmatpush1.xpose.msra.mxu0 0.0
    %811 = vmatprep.subr.mxu0 0.0
    %812 = vmatpush1.xpose.msra.mxu0 0.0
    %813 = vmatprep.subr.mxu0 0.0
    %814 = vmatpush1.xpose.msra.mxu0 0.0
    %815 = vmatprep.subr.mxu0 0.0
    %816 = vmatpush1.xpose.msra.mxu0 0.0
    %817 = vmatprep.subr.mxu0 0.0
    %818 = vmatpush1.xpose.msra.mxu0 0.0
    %819 = vmatprep.subr.mxu0 0.0
    %820 = vmatpush1.xpose.msra.mxu0 0.0
    %821 = vmatprep.subr.mxu0 0.0
    %822 = vmatpush1.xpose.msra.mxu0 0.0
    %823 = vmatprep.subr.mxu0 0.0
    %824 = vmatpush1.xpose.msra.mxu0 0.0
    %825 = vmatprep.subr.mxu0 0.0
    %826 = vmatpush1.xpose.msra.mxu0 0.0
    %827 = vmatprep.subr.mxu0 0.0
    %828 = vmatpush1.xpose.msra.mxu0 0.0
    %829 = vmatprep.subr.mxu0 0.0
    %830 = vmatpush1.xpose.msra.mxu0 0.0
    %831 = vmatprep.subr.mxu0 0.0
    %832 = vmatpush1.xpose.msra.mxu0 0.0
    %833 = vmatprep.mubr.f32.mxu0 0.0
    %834 = vmatmul.mubr.f32.gmra.mrb[0].mxu0 %v765
    %v835 = vpop.f32.mrb[0].mxu0
    %v836 = vadd.f32 0.0, %v835
    %v837 = vpop.f32.mrb[0].mxu0
    %838 = vdwg.mxu0
    %v839 = vmul.f32 %v836, 0.35355338
    %v840 = vmul.f32 %v839, 1.442695
    %v841 = vpow.pop %v840
    %842 = vrot.lane.b32.xlu0 %v320, 112
    %v843 = vpop.permute.xlu0 %842
    %v845 = vsel %vm581, %v843, 0.0
    %846 = vadd.xlane.f32.xlu0 %v845
    %v847 = vpop.xlane.xlu0 %846
    %v848 = vmul.f32 %v847, %v585
    %v849 = vsub.f32 %v320, %v848
    %v850 = vmul.f32 %v849, %v849
    %852 = vrot.lane.b32.xlu0 %v850, 112
    %v853 = vpop.permute.xlu0 %852
    %v855 = vsel %vm581, %v853, 0.0
    %856 = vadd.xlane.f32.xlu0 %v855
    %v857 = vpop.xlane.xlu0 %856
    %v858 = vmul.f32 %v857, %v592
    %v859 = vadd.f32 %v858, 1e-08
    %v860 = vrsqrt.pop %v859
    %v861 = vmul.f32 %v859, %v860
    %vm862 = vcmp.eq.f32.partialorder %v859, inf
    %v863 = vsel %vm862, %v859, %v861
    %vm864 = vcmp.eq.f32.partialorder %v859, 0.0
    %v865 = vand.u32 %v859, 2147483648
    %v866 = vsel %vm864, %v865, %v863
    %v867 = vrcp.pop %v866
    %v868 = vmul.f32 %v849, %v867
    %869 = vrot.lane.b32.xlu0 %v578, 112
    %v870 = vpop.permute.xlu0 %869
    %v872 = vsel %vm581, %v870, 0.0
    %873 = vadd.xlane.f32.xlu0 %v872
    %v874 = vpop.xlane.xlu0 %873
    %v875 = vmul.f32 %v874, %v585
    %v876 = vsub.f32 %v578, %v875
    %v877 = vmul.f32 %v876, %v876
    %879 = vrot.lane.b32.xlu0 %v877, 112
    %v880 = vpop.permute.xlu0 %879
    %v882 = vsel %vm581, %v880, 0.0
    %883 = vadd.xlane.f32.xlu0 %v882
    %v884 = vpop.xlane.xlu0 %883
    %v885 = vmul.f32 %v884, %v592
    %v886 = vadd.f32 %v885, 1e-08
    %v887 = vrsqrt.pop %v886
    %v888 = vmul.f32 %v886, %v887
    %vm889 = vcmp.eq.f32.partialorder %v886, inf
    %v890 = vsel %vm889, %v886, %v888
    %vm891 = vcmp.eq.f32.partialorder %v886, 0.0
    %v892 = vand.u32 %v886, 2147483648
    %v893 = vsel %vm891, %v892, %v890
    %v894 = vrcp.pop %v893
    %v895 = vmul.f32 %v876, %v894
    %897 = vrot.lane.b32.xlu0 %v868, 112
    %v898 = vpop.permute.xlu0 %897
    %900 = vrot.lane.b32.xlu0 %v895, 112
    %v901 = vpop.permute.xlu0 %900
    %v902 = vsel %vm581, %v898, 0
    %v904 = vsel %vm581, %v901, 0
    %906 = vmatprep.subr.mxu0 0.0
    %907 = vmatpush1.xpose.msra.mxu0 %v904
    %908 = vmatprep.subr.mxu0 0.0
    %909 = vmatpush1.xpose.msra.mxu0 0.0
    %910 = vmatprep.subr.mxu0 0.0
    %911 = vmatpush1.xpose.msra.mxu0 0.0
    %912 = vmatprep.subr.mxu0 0.0
    %913 = vmatpush1.xpose.msra.mxu0 0.0
    %914 = vmatprep.subr.mxu0 0.0
    %915 = vmatpush1.xpose.msra.mxu0 0.0
    %916 = vmatprep.subr.mxu0 0.0
    %917 = vmatpush1.xpose.msra.mxu0 0.0
    %918 = vmatprep.subr.mxu0 0.0
    %919 = vmatpush1.xpose.msra.mxu0 0.0
    %920 = vmatprep.subr.mxu0 0.0
    %921 = vmatpush1.xpose.msra.mxu0 0.0
    %922 = vmatprep.subr.mxu0 0.0
    %923 = vmatpush1.xpose.msra.mxu0 0.0
    %924 = vmatprep.subr.mxu0 0.0
    %925 = vmatpush1.xpose.msra.mxu0 0.0
    %926 = vmatprep.subr.mxu0 0.0
    %927 = vmatpush1.xpose.msra.mxu0 0.0
    %928 = vmatprep.subr.mxu0 0.0
    %929 = vmatpush1.xpose.msra.mxu0 0.0
    %930 = vmatprep.subr.mxu0 0.0
    %931 = vmatpush1.xpose.msra.mxu0 0.0
    %932 = vmatprep.subr.mxu0 0.0
    %933 = vmatpush1.xpose.msra.mxu0 0.0
    %934 = vmatprep.subr.mxu0 0.0
    %935 = vmatpush1.xpose.msra.mxu0 0.0
    %936 = vmatprep.subr.mxu0 0.0
    %937 = vmatpush1.xpose.msra.mxu0 0.0
    %938 = vmatprep.subr.mxu0 0.0
    %939 = vmatpush1.xpose.msra.mxu0 0.0
    %940 = vmatprep.subr.mxu0 0.0
    %941 = vmatpush1.xpose.msra.mxu0 0.0
    %942 = vmatprep.subr.mxu0 0.0
    %943 = vmatpush1.xpose.msra.mxu0 0.0
    %944 = vmatprep.subr.mxu0 0.0
    %945 = vmatpush1.xpose.msra.mxu0 0.0
    %946 = vmatprep.subr.mxu0 0.0
    %947 = vmatpush1.xpose.msra.mxu0 0.0
    %948 = vmatprep.subr.mxu0 0.0
    %949 = vmatpush1.xpose.msra.mxu0 0.0
    %950 = vmatprep.subr.mxu0 0.0
    %951 = vmatpush1.xpose.msra.mxu0 0.0
    %952 = vmatprep.subr.mxu0 0.0
    %953 = vmatpush1.xpose.msra.mxu0 0.0
    %954 = vmatprep.subr.mxu0 0.0
    %955 = vmatpush1.xpose.msra.mxu0 0.0
    %956 = vmatprep.subr.mxu0 0.0
    %957 = vmatpush1.xpose.msra.mxu0 0.0
    %958 = vmatprep.subr.mxu0 0.0
    %959 = vmatpush1.xpose.msra.mxu0 0.0
    %960 = vmatprep.subr.mxu0 0.0
    %961 = vmatpush1.xpose.msra.mxu0 0.0
    %962 = vmatprep.subr.mxu0 0.0
    %963 = vmatpush1.xpose.msra.mxu0 0.0
    %964 = vmatprep.subr.mxu0 0.0
    %965 = vmatpush1.xpose.msra.mxu0 0.0
    %966 = vmatprep.subr.mxu0 0.0
    %967 = vmatpush1.xpose.msra.mxu0 0.0
    %968 = vmatprep.subr.mxu0 0.0
    %969 = vmatpush1.xpose.msra.mxu0 0.0
    %970 = vmatprep.mubr.f32.mxu0 0.0
    %971 = vmatmul.mubr.f32.gmra.mrb[0].mxu0 %v902
    %v972 = vpop.f32.mrb[0].mxu0
    %v973 = vadd.f32 0.0, %v972
    %v974 = vpop.f32.mrb[0].mxu0
    %975 = vdwg.mxu0
    %v976 = vmul.f32 %v973, 0.35355338
    %v977 = vmul.f32 %v976, 1.442695
    %v978 = vpow.pop %v977
    %v979 = vld [vmem:[%s2] sm:$0xff]
    %v980 = vld [vmem:[%s2 + $0x8] sm:$0xff]
    %v981 = vld [vmem:[%s2 + $0x10] sm:$0xff]
    %v982 = vld [vmem:[#allocation2] sm:$0x1]
    %v983 = vld [vmem:[#allocation2 + $0x1] sm:$0x1]
    %v984 = vld [vmem:[#allocation2 + $0x2] sm:$0x1]
    // While loop
    $region70: #{tpu_custom_call.1} parent=1 // loop_pre_header
      _
    $region71: #{tpu_custom_call.1} parent=1 // loop_header
      %v986 = vphi %v702, %v2270
      %v987 = vphi %v841, %v2271
      %v988 = vphi %v978, %v2272
      %v989 = vphi 0.0, %v2273
      %v990 = vphi 0.0, %v2274
      %v991 = vphi 0.0, %v2275
      %s992 = sphi 0, %s2276
      %p993 = scmp.lt.s32.totalorder %s992, 500
      %vm994 = vcmask 0
      %v995 = vsel %vm994, %v989, inf
      %v996 = vsel %vm994, %v990, inf
      %v997 = vsel %vm994, %v991, inf
      %v998 = vmin.f32 %v995, %v996
      %v999 = vmin.f32 %v998, %v997
      %1000 = vmin.xlane.f32.xlu0 %v999
      %v1001 = vpop.xlane.xlu0 %1000
      %v1002 = vrot.slane %v1001, 4
      %v1003 = vmin.f32 %v1001, %v1002
      %v1004 = vrot.slane %v1003, 2
      %v1005 = vmin.f32 %v1003, %v1004
      %v1006 = vrot.slane %v1005, 1
      %v1007 = vmin.f32 %v1005, %v1006
      %s1008 = vtos %v1007
      %p1009 = scmp.lt.f32.partialorder %s1008, 0.5
      %p1010 = pnand %p993, %p1009
      %p1011 = pneg %p1010
    $region72: #{tpu_custom_call.1} parent=1 // loop_header_branch
      %1013 = sbr.rel (%p1010) target = $region76
    $region73: #{tpu_custom_call.1} parent=1 // loop_body
      %v1014 = vsel %vm581, %v986, 0.0
      %v1015 = vrot.slane %v1014, 4
      %v1016 = vadd.f32 %v1014, %v1015
      %v1017 = vrot.slane %v1016, 2
      %v1018 = vadd.f32 %v1016, %v1017
      %v1019 = vrot.slane %v1018, 1
      %v1020 = vadd.f32 %v1018, %v1019
      %v1021 = vsel %vm581, %v987, 0.0
      %v1022 = vrot.slane %v1021, 4
      %v1023 = vadd.f32 %v1021, %v1022
      %v1024 = vrot.slane %v1023, 2
      %v1025 = vadd.f32 %v1023, %v1024
      %v1026 = vrot.slane %v1025, 1
      %v1027 = vadd.f32 %v1025, %v1026
      %v1028 = vsel %vm581, %v988, 0.0
      %v1029 = vrot.slane %v1028, 4
      %v1030 = vadd.f32 %v1028, %v1029
      %v1031 = vrot.slane %v1030, 2
      %v1032 = vadd.f32 %v1030, %v1031
      %v1033 = vrot.slane %v1032, 1
      %v1034 = vadd.f32 %v1032, %v1033
      %v1035 = vadd.f32 %v1020, 1e-08
      %v1036 = vadd.f32 %v1027, 1e-08
      %v1037 = vadd.f32 %v1034, 1e-08
      %v1038 = vrcp.pop %v1035
      %v1039 = vrcp.pop %v1036
      %v1040 = vrcp.pop %v1037
      %v1041 = vmul.f32 %v982, %v1038
      %v1042 = vmul.f32 %v983, %v1039
      %v1043 = vmul.f32 %v984, %v1040
      %v1047 = vlaneseq
      %v1048 = vshrl.u32 %v1047, 7
      %v1049 = vsub.s32 0, %v1048
      %v1050 = vrot.slane %v1041, %v1049
      %v1051 = vlaneseq
      %v1052 = vshrl.u32 %v1051, 7
      %v1053 = vsub.s32 0, %v1052
      %v1054 = vrot.slane %v1042, %v1053
      %v1055 = vlaneseq
      %v1056 = vshrl.u32 %v1055, 7
      %v1057 = vsub.s32 0, %v1056
      %v1058 = vrot.slane %v1043, %v1057
      %v1062 = vmul.f32 %v986, %v1050
      %v1063 = vmul.f32 %v987, %v1054
      %v1064 = vmul.f32 %v988, %v1058
      %v1065 = vsel %vm581, %v1062, 0.0
      %1066 = vadd.xlane.f32.xlu0 %v1065
      %v1067 = vpop.xlane.xlu0 %1066
      %v1068 = vsel %vm581, %v1063, 0.0
      %1069 = vadd.xlane.f32.xlu0 %v1068
      %v1070 = vpop.xlane.xlu0 %1069
      %v1071 = vsel %vm581, %v1064, 0.0
      %1072 = vadd.xlane.f32.xlu0 %v1071
      %v1073 = vpop.xlane.xlu0 %1072
      %v1074 = vsub.f32 %v1067, %v979
      %v1075 = vsub.f32 %v1070, %v980
      %v1076 = vsub.f32 %v1073, %v981
      %v1077 = vand.u32 2147483647, %v1074
      %v1078 = vand.u32 2147483647, %v1075
      %v1079 = vand.u32 2147483647, %v1076
      %vm1080 = vcmask 7168
      %v1081 = vsel %vm1080, %v1077, -inf
      %v1082 = vrot.slane %v1081, 4
      %v1083 = vmax.f32 %v1081, %v1082
      %v1084 = vrot.slane %v1083, 2
      %v1085 = vmax.f32 %v1083, %v1084
      %v1086 = vrot.slane %v1085, 1
      %v1087 = vmax.f32 %v1085, %v1086
      %v1088 = vsel %vm1080, %v1078, -inf
      %v1089 = vrot.slane %v1088, 4
      %v1090 = vmax.f32 %v1088, %v1089
      %v1091 = vrot.slane %v1090, 2
      %v1092 = vmax.f32 %v1090, %v1091
      %v1093 = vrot.slane %v1092, 1
      %v1094 = vmax.f32 %v1092, %v1093
      %v1095 = vsel %vm1080, %v1079, -inf
      %v1096 = vrot.slane %v1095, 4
      %v1097 = vmax.f32 %v1095, %v1096
      %v1098 = vrot.slane %v1097, 2
      %v1099 = vmax.f32 %v1097, %v1098
      %v1100 = vrot.slane %v1099, 1
      %v1101 = vmax.f32 %v1099, %v1100
      %vm1102 = vcmp.le.f32.partialorder %v1087, 0.01
      %vm1103 = vcmp.le.f32.partialorder %v1094, 0.01
      %vm1104 = vcmp.le.f32.partialorder %v1101, 0.01
      %v1105 = vsel %vm1102, 1, 0
      %v1106 = vsel %vm1103, 1, 0
      %v1107 = vsel %vm1104, 1, 0
      %v1108 = vcvt.s32.f32 %v1105
      %v1109 = vcvt.s32.f32 %v1106
      %v1110 = vcvt.s32.f32 %v1107
      %v1111 = vadd.f32 %v1067, 1e-08
      %v1112 = vadd.f32 %v1070, 1e-08
      %v1113 = vadd.f32 %v1073, 1e-08
      %v1114 = vrcp.pop %v1111
      %v1115 = vrcp.pop %v1112
      %v1116 = vrcp.pop %v1113
      %v1117 = vmul.f32 %v979, %v1114
      %v1118 = vmul.f32 %v980, %v1115
      %v1119 = vmul.f32 %v981, %v1116
      %1121 = vset.pattern.permute.xlu0 0
      %1122 = vperm.xlu0 %1121, %v1117
      %v1123 = vpop.permute.xlu0 %1122
      %1126 = vset.pattern.permute.xlu0 0
      %1127 = vperm.xlu0 %1126, %v1118
      %v1128 = vpop.permute.xlu0 %1127
      %1131 = vset.pattern.permute.xlu0 0
      %1132 = vperm.xlu0 %1131, %v1119
      %v1133 = vpop.permute.xlu0 %1132
      %v1135 = vmul.f32 %v1062, %v1123
      %v1136 = vmul.f32 %v1063, %v1128
      %v1137 = vmul.f32 %v1064, %v1133
      %v1138 = vsel %vm581, %v1135, 0.0
      %v1139 = vrot.slane %v1138, 4
      %v1140 = vadd.f32 %v1138, %v1139
      %v1141 = vrot.slane %v1140, 2
      %v1142 = vadd.f32 %v1140, %v1141
      %v1143 = vrot.slane %v1142, 1
      %v1144 = vadd.f32 %v1142, %v1143
      %v1145 = vsel %vm581, %v1136, 0.0
      %v1146 = vrot.slane %v1145, 4
      %v1147 = vadd.f32 %v1145, %v1146
      %v1148 = vrot.slane %v1147, 2
      %v1149 = vadd.f32 %v1147, %v1148
      %v1150 = vrot.slane %v1149, 1
      %v1151 = vadd.f32 %v1149, %v1150
      %v1152 = vsel %vm581, %v1137, 0.0
      %v1153 = vrot.slane %v1152, 4
      %v1154 = vadd.f32 %v1152, %v1153
      %v1155 = vrot.slane %v1154, 2
      %v1156 = vadd.f32 %v1154, %v1155
      %v1157 = vrot.slane %v1156, 1
      %v1158 = vadd.f32 %v1156, %v1157
      %v1159 = vsub.f32 %v1144, %v982
      %v1160 = vsub.f32 %v1151, %v983
      %v1161 = vsub.f32 %v1158, %v984
      %v1162 = vand.u32 2147483647, %v1159
      %v1163 = vand.u32 2147483647, %v1160
      %v1164 = vand.u32 2147483647, %v1161
      %vm1165 = vcmask 57344
      %v1166 = vsel %vm1165, %v1162, -inf
      %1167 = vmax.xlane.f32.xlu0 %v1166
      %v1168 = vpop.xlane.xlu0 %1167
      %v1169 = vsel %vm1165, %v1163, -inf
      %1170 = vmax.xlane.f32.xlu0 %v1169
      %v1171 = vpop.xlane.xlu0 %1170
      %v1172 = vsel %vm1165, %v1164, -inf
      %1173 = vmax.xlane.f32.xlu0 %v1172
      %v1174 = vpop.xlane.xlu0 %1173
      %vm1175 = vcmp.le.f32.partialorder %v1168, 0.01
      %vm1176 = vcmp.le.f32.partialorder %v1171, 0.01
      %vm1177 = vcmp.le.f32.partialorder %v1174, 0.01
      %v1178 = vsel %vm1175, 1, 0
      %v1179 = vsel %vm1176, 1, 0
      %v1180 = vsel %vm1177, 1, 0
      %v1181 = vcvt.s32.f32 %v1178
      %v1182 = vcvt.s32.f32 %v1179
      %v1183 = vcvt.s32.f32 %v1180
      %1185 = vset.pattern.permute.xlu0 0
      %1186 = vperm.xlu0 %1185, %v1108
      %v1187 = vpop.permute.xlu0 %1186
      %1190 = vset.pattern.permute.xlu0 0
      %1191 = vperm.xlu0 %1190, %v1109
      %v1192 = vpop.permute.xlu0 %1191
      %1195 = vset.pattern.permute.xlu0 0
      %1196 = vperm.xlu0 %1195, %v1110
      %v1197 = vpop.permute.xlu0 %1196
      %v1199 = vmul.f32 %v1187, %v1062
      %v1200 = vmul.f32 %v1192, %v1063
      %v1201 = vmul.f32 %v1197, %v1064
      %v1202 = vsub.f32 1.0, %v1108
      %v1203 = vsub.f32 1.0, %v1109
      %v1204 = vsub.f32 1.0, %v1110
      %1206 = vset.pattern.permute.xlu0 0
      %1207 = vperm.xlu0 %1206, %v1202
      %v1208 = vpop.permute.xlu0 %1207
      %1211 = vset.pattern.permute.xlu0 0
      %1212 = vperm.xlu0 %1211, %v1203
      %v1213 = vpop.permute.xlu0 %1212
      %1216 = vset.pattern.permute.xlu0 0
      %1217 = vperm.xlu0 %1216, %v1204
      %v1218 = vpop.permute.xlu0 %1217
      %v1220 = vmul.f32 %v1208, %v1135
      %v1221 = vmul.f32 %v1213, %v1136
      %v1222 = vmul.f32 %v1218, %v1137
      %v1223 = vadd.f32 %v1199, %v1220
      %v1224 = vadd.f32 %v1200, %v1221
      %v1225 = vadd.f32 %v1201, %v1222
      %v1226 = vmax.f32 %v1108, %v1181
      %v1227 = vmax.f32 %v1109, %v1182
      %v1228 = vmax.f32 %v1110, %v1183
      %s1230 = vtos %v989
      %v1231 = vstv %s1230
      %s1234 = vtos %v990
      %v1235 = vstv %s1234
      %s1238 = vtos %v991
      %v1239 = vstv %s1238
      %v1241 = vmul.f32 %v1231, %v986
      %v1242 = vmul.f32 %v1235, %v987
      %v1243 = vmul.f32 %v1239, %v988
      %v1244 = vsub.f32 1.0, %v989
      %v1245 = vsub.f32 1.0, %v990
      %v1246 = vsub.f32 1.0, %v991
      %s1248 = vtos %v1244
      %v1249 = vstv %s1248
      %s1252 = vtos %v1245
      %v1253 = vstv %s1252
      %s1256 = vtos %v1246
      %v1257 = vstv %s1256
      %v1259 = vmul.f32 %v1249, %v1223
      %v1260 = vmul.f32 %v1253, %v1224
      %v1261 = vmul.f32 %v1257, %v1225
      %v1262 = vadd.f32 %v1241, %v1259
      %v1263 = vadd.f32 %v1242, %v1260
      %v1264 = vadd.f32 %v1243, %v1261
      %v1265 = vmax.f32 %v989, %v1226
      %v1266 = vmax.f32 %v990, %v1227
      %v1267 = vmax.f32 %v991, %v1228
      %v1268 = vsel %vm581, %v1262, 0.0
      %v1269 = vrot.slane %v1268, 4
      %v1270 = vadd.f32 %v1268, %v1269
      %v1271 = vrot.slane %v1270, 2
      %v1272 = vadd.f32 %v1270, %v1271
      %v1273 = vrot.slane %v1272, 1
      %v1274 = vadd.f32 %v1272, %v1273
      %v1275 = vsel %vm581, %v1263, 0.0
      %v1276 = vrot.slane %v1275, 4
      %v1277 = vadd.f32 %v1275, %v1276
      %v1278 = vrot.slane %v1277, 2
      %v1279 = vadd.f32 %v1277, %v1278
      %v1280 = vrot.slane %v1279, 1
      %v1281 = vadd.f32 %v1279, %v1280
      %v1282 = vsel %vm581, %v1264, 0.0
      %v1283 = vrot.slane %v1282, 4
      %v1284 = vadd.f32 %v1282, %v1283
      %v1285 = vrot.slane %v1284, 2
      %v1286 = vadd.f32 %v1284, %v1285
      %v1287 = vrot.slane %v1286, 1
      %v1288 = vadd.f32 %v1286, %v1287
      %v1289 = vadd.f32 %v1274, 1e-08
      %v1290 = vadd.f32 %v1281, 1e-08
      %v1291 = vadd.f32 %v1288, 1e-08
      %v1292 = vrcp.pop %v1289
      %v1293 = vrcp.pop %v1290
      %v1294 = vrcp.pop %v1291
      %v1295 = vmul.f32 %v982, %v1292
      %v1296 = vmul.f32 %v983, %v1293
      %v1297 = vmul.f32 %v984, %v1294
      %v1301 = vlaneseq
      %v1302 = vshrl.u32 %v1301, 7
      %v1303 = vsub.s32 0, %v1302
      %v1304 = vrot.slane %v1295, %v1303
      %v1305 = vlaneseq
      %v1306 = vshrl.u32 %v1305, 7
      %v1307 = vsub.s32 0, %v1306
      %v1308 = vrot.slane %v1296, %v1307
      %v1309 = vlaneseq
      %v1310 = vshrl.u32 %v1309, 7
      %v1311 = vsub.s32 0, %v1310
      %v1312 = vrot.slane %v1297, %v1311
      %v1316 = vmul.f32 %v1262, %v1304
      %v1317 = vmul.f32 %v1263, %v1308
      %v1318 = vmul.f32 %v1264, %v1312
      %v1319 = vsel %vm581, %v1316, 0.0
      %1320 = vadd.xlane.f32.xlu0 %v1319
      %v1321 = vpop.xlane.xlu0 %1320
      %v1322 = vsel %vm581, %v1317, 0.0
      %1323 = vadd.xlane.f32.xlu0 %v1322
      %v1324 = vpop.xlane.xlu0 %1323
      %v1325 = vsel %vm581, %v1318, 0.0
      %1326 = vadd.xlane.f32.xlu0 %v1325
      %v1327 = vpop.xlane.xlu0 %1326
      %v1328 = vsub.f32 %v1321, %v979
      %v1329 = vsub.f32 %v1324, %v980
      %v1330 = vsub.f32 %v1327, %v981
      %v1331 = vand.u32 2147483647, %v1328
      %v1332 = vand.u32 2147483647, %v1329
      %v1333 = vand.u32 2147483647, %v1330
      %v1334 = vsel %vm1080, %v1331, -inf
      %v1335 = vrot.slane %v1334, 4
      %v1336 = vmax.f32 %v1334, %v1335
      %v1337 = vrot.slane %v1336, 2
      %v1338 = vmax.f32 %v1336, %v1337
      %v1339 = vrot.slane %v1338, 1
      %v1340 = vmax.f32 %v1338, %v1339
      %v1341 = vsel %vm1080, %v1332, -inf
      %v1342 = vrot.slane %v1341, 4
      %v1343 = vmax.f32 %v1341, %v1342
      %v1344 = vrot.slane %v1343, 2
      %v1345 = vmax.f32 %v1343, %v1344
      %v1346 = vrot.slane %v1345, 1
      %v1347 = vmax.f32 %v1345, %v1346
      %v1348 = vsel %vm1080, %v1333, -inf
      %v1349 = vrot.slane %v1348, 4
      %v1350 = vmax.f32 %v1348, %v1349
      %v1351 = vrot.slane %v1350, 2
      %v1352 = vmax.f32 %v1350, %v1351
      %v1353 = vrot.slane %v1352, 1
      %v1354 = vmax.f32 %v1352, %v1353
      %vm1355 = vcmp.le.f32.partialorder %v1340, 0.01
      %vm1356 = vcmp.le.f32.partialorder %v1347, 0.01
      %vm1357 = vcmp.le.f32.partialorder %v1354, 0.01
      %v1358 = vsel %vm1355, 1, 0
      %v1359 = vsel %vm1356, 1, 0
      %v1360 = vsel %vm1357, 1, 0
      %v1361 = vcvt.s32.f32 %v1358
      %v1362 = vcvt.s32.f32 %v1359
      %v1363 = vcvt.s32.f32 %v1360
      %v1364 = vadd.f32 %v1321, 1e-08
      %v1365 = vadd.f32 %v1324, 1e-08
      %v1366 = vadd.f32 %v1327, 1e-08
      %v1367 = vrcp.pop %v1364
      %v1368 = vrcp.pop %v1365
      %v1369 = vrcp.pop %v1366
      %v1370 = vmul.f32 %v979, %v1367
      %v1371 = vmul.f32 %v980, %v1368
      %v1372 = vmul.f32 %v981, %v1369
      %1374 = vset.pattern.permute.xlu0 0
      %1375 = vperm.xlu0 %1374, %v1370
      %v1376 = vpop.permute.xlu0 %1375
      %1379 = vset.pattern.permute.xlu0 0
      %1380 = vperm.xlu0 %1379, %v1371
      %v1381 = vpop.permute.xlu0 %1380
      %1384 = vset.pattern.permute.xlu0 0
      %1385 = vperm.xlu0 %1384, %v1372
      %v1386 = vpop.permute.xlu0 %1385
      %v1388 = vmul.f32 %v1316, %v1376
      %v1389 = vmul.f32 %v1317, %v1381
      %v1390 = vmul.f32 %v1318, %v1386
      %v1391 = vsel %vm581, %v1388, 0.0
      %v1392 = vrot.slane %v1391, 4
      %v1393 = vadd.f32 %v1391, %v1392
      %v1394 = vrot.slane %v1393, 2
      %v1395 = vadd.f32 %v1393, %v1394
      %v1396 = vrot.slane %v1395, 1
      %v1397 = vadd.f32 %v1395, %v1396
      %v1398 = vsel %vm581, %v1389, 0.0
      %v1399 = vrot.slane %v1398, 4
      %v1400 = vadd.f32 %v1398, %v1399
      %v1401 = vrot.slane %v1400, 2
      %v1402 = vadd.f32 %v1400, %v1401
      %v1403 = vrot.slane %v1402, 1
      %v1404 = vadd.f32 %v1402, %v1403
      %v1405 = vsel %vm581, %v1390, 0.0
      %v1406 = vrot.slane %v1405, 4
      %v1407 = vadd.f32 %v1405, %v1406
      %v1408 = vrot.slane %v1407, 2
      %v1409 = vadd.f32 %v1407, %v1408
      %v1410 = vrot.slane %v1409, 1
      %v1411 = vadd.f32 %v1409, %v1410
      %v1412 = vsub.f32 %v1397, %v982
      %v1413 = vsub.f32 %v1404, %v983
      %v1414 = vsub.f32 %v1411, %v984
      %v1415 = vand.u32 2147483647, %v1412
      %v1416 = vand.u32 2147483647, %v1413
      %v1417 = vand.u32 2147483647, %v1414
      %v1418 = vsel %vm1165, %v1415, -inf
      %1419 = vmax.xlane.f32.xlu0 %v1418
      %v1420 = vpop.xlane.xlu0 %1419
      %v1421 = vsel %vm1165, %v1416, -inf
      %1422 = vmax.xlane.f32.xlu0 %v1421
      %v1423 = vpop.xlane.xlu0 %1422
      %v1424 = vsel %vm1165, %v1417, -inf
      %1425 = vmax.xlane.f32.xlu0 %v1424
      %v1426 = vpop.xlane.xlu0 %1425
      %vm1427 = vcmp.le.f32.partialorder %v1420, 0.01
      %vm1428 = vcmp.le.f32.partialorder %v1423, 0.01
      %vm1429 = vcmp.le.f32.partialorder %v1426, 0.01
      %v1430 = vsel %vm1427, 1, 0
      %v1431 = vsel %vm1428, 1, 0
      %v1432 = vsel %vm1429, 1, 0
      %v1433 = vcvt.s32.f32 %v1430
      %v1434 = vcvt.s32.f32 %v1431
      %v1435 = vcvt.s32.f32 %v1432
      %1437 = vset.pattern.permute.xlu0 0
      %1438 = vperm.xlu0 %1437, %v1361
      %v1439 = vpop.permute.xlu0 %1438
      %1442 = vset.pattern.permute.xlu0 0
      %1443 = vperm.xlu0 %1442, %v1362
      %v1444 = vpop.permute.xlu0 %1443
      %1447 = vset.pattern.permute.xlu0 0
      %1448 = vperm.xlu0 %1447, %v1363
      %v1449 = vpop.permute.xlu0 %1448
      %v1451 = vmul.f32 %v1439, %v1316
      %v1452 = vmul.f32 %v1444, %v1317
      %v1453 = vmul.f32 %v1449, %v1318
      %v1454 = vsub.f32 1.0, %v1361
      %v1455 = vsub.f32 1.0, %v1362
      %v1456 = vsub.f32 1.0, %v1363
      %1458 = vset.pattern.permute.xlu0 0
      %1459 = vperm.xlu0 %1458, %v1454
      %v1460 = vpop.permute.xlu0 %1459
      %1463 = vset.pattern.permute.xlu0 0
      %1464 = vperm.xlu0 %1463, %v1455
      %v1465 = vpop.permute.xlu0 %1464
      %1468 = vset.pattern.permute.xlu0 0
      %1469 = vperm.xlu0 %1468, %v1456
      %v1470 = vpop.permute.xlu0 %1469
      %v1472 = vmul.f32 %v1460, %v1388
      %v1473 = vmul.f32 %v1465, %v1389
      %v1474 = vmul.f32 %v1470, %v1390
      %v1475 = vadd.f32 %v1451, %v1472
      %v1476 = vadd.f32 %v1452, %v1473
      %v1477 = vadd.f32 %v1453, %v1474
      %v1478 = vmax.f32 %v1361, %v1433
      %v1479 = vmax.f32 %v1362, %v1434
      %v1480 = vmax.f32 %v1363, %v1435
      %s1482 = vtos %v1265
      %v1483 = vstv %s1482
      %s1486 = vtos %v1266
      %v1487 = vstv %s1486
      %s1490 = vtos %v1267
      %v1491 = vstv %s1490
      %v1493 = vmul.f32 %v1483, %v1262
      %v1494 = vmul.f32 %v1487, %v1263
      %v1495 = vmul.f32 %v1491, %v1264
      %v1496 = vsub.f32 1.0, %v1265
      %v1497 = vsub.f32 1.0, %v1266
      %v1498 = vsub.f32 1.0, %v1267
      %s1500 = vtos %v1496
      %v1501 = vstv %s1500
      %s1504 = vtos %v1497
      %v1505 = vstv %s1504
      %s1508 = vtos %v1498
      %v1509 = vstv %s1508
      %v1511 = vmul.f32 %v1501, %v1475
      %v1512 = vmul.f32 %v1505, %v1476
      %v1513 = vmul.f32 %v1509, %v1477
      %v1514 = vadd.f32 %v1493, %v1511
      %v1515 = vadd.f32 %v1494, %v1512
      %v1516 = vadd.f32 %v1495, %v1513
      %v1517 = vmax.f32 %v1265, %v1478
      %v1518 = vmax.f32 %v1266, %v1479
      %v1519 = vmax.f32 %v1267, %v1480
      %v1520 = vsel %vm581, %v1514, 0.0
      %v1521 = vrot.slane %v1520, 4
      %v1522 = vadd.f32 %v1520, %v1521
      %v1523 = vrot.slane %v1522, 2
      %v1524 = vadd.f32 %v1522, %v1523
      %v1525 = vrot.slane %v1524, 1
      %v1526 = vadd.f32 %v1524, %v1525
      %v1527 = vsel %vm581, %v1515, 0.0
      %v1528 = vrot.slane %v1527, 4
      %v1529 = vadd.f32 %v1527, %v1528
      %v1530 = vrot.slane %v1529, 2
      %v1531 = vadd.f32 %v1529, %v1530
      %v1532 = vrot.slane %v1531, 1
      %v1533 = vadd.f32 %v1531, %v1532
      %v1534 = vsel %vm581, %v1516, 0.0
      %v1535 = vrot.slane %v1534, 4
      %v1536 = vadd.f32 %v1534, %v1535
      %v1537 = vrot.slane %v1536, 2
      %v1538 = vadd.f32 %v1536, %v1537
      %v1539 = vrot.slane %v1538, 1
      %v1540 = vadd.f32 %v1538, %v1539
      %v1541 = vadd.f32 %v1526, 1e-08
      %v1542 = vadd.f32 %v1533, 1e-08
      %v1543 = vadd.f32 %v1540, 1e-08
      %v1544 = vrcp.pop %v1541
      %v1545 = vrcp.pop %v1542
      %v1546 = vrcp.pop %v1543
      %v1547 = vmul.f32 %v982, %v1544
      %v1548 = vmul.f32 %v983, %v1545
      %v1549 = vmul.f32 %v984, %v1546
      %v1553 = vlaneseq
      %v1554 = vshrl.u32 %v1553, 7
      %v1555 = vsub.s32 0, %v1554
      %v1556 = vrot.slane %v1547, %v1555
      %v1557 = vlaneseq
      %v1558 = vshrl.u32 %v1557, 7
      %v1559 = vsub.s32 0, %v1558
      %v1560 = vrot.slane %v1548, %v1559
      %v1561 = vlaneseq
      %v1562 = vshrl.u32 %v1561, 7
      %v1563 = vsub.s32 0, %v1562
      %v1564 = vrot.slane %v1549, %v1563
      %v1568 = vmul.f32 %v1514, %v1556
      %v1569 = vmul.f32 %v1515, %v1560
      %v1570 = vmul.f32 %v1516, %v1564
      %v1571 = vsel %vm581, %v1568, 0.0
      %1572 = vadd.xlane.f32.xlu0 %v1571
      %v1573 = vpop.xlane.xlu0 %1572
      %v1574 = vsel %vm581, %v1569, 0.0
      %1575 = vadd.xlane.f32.xlu0 %v1574
      %v1576 = vpop.xlane.xlu0 %1575
      %v1577 = vsel %vm581, %v1570, 0.0
      %1578 = vadd.xlane.f32.xlu0 %v1577
      %v1579 = vpop.xlane.xlu0 %1578
      %v1580 = vsub.f32 %v1573, %v979
      %v1581 = vsub.f32 %v1576, %v980
      %v1582 = vsub.f32 %v1579, %v981
      %v1583 = vand.u32 2147483647, %v1580
      %v1584 = vand.u32 2147483647, %v1581
      %v1585 = vand.u32 2147483647, %v1582
      %v1586 = vsel %vm1080, %v1583, -inf
      %v1587 = vrot.slane %v1586, 4
      %v1588 = vmax.f32 %v1586, %v1587
      %v1589 = vrot.slane %v1588, 2
      %v1590 = vmax.f32 %v1588, %v1589
      %v1591 = vrot.slane %v1590, 1
      %v1592 = vmax.f32 %v1590, %v1591
      %v1593 = vsel %vm1080, %v1584, -inf
      %v1594 = vrot.slane %v1593, 4
      %v1595 = vmax.f32 %v1593, %v1594
      %v1596 = vrot.slane %v1595, 2
      %v1597 = vmax.f32 %v1595, %v1596
      %v1598 = vrot.slane %v1597, 1
      %v1599 = vmax.f32 %v1597, %v1598
      %v1600 = vsel %vm1080, %v1585, -inf
      %v1601 = vrot.slane %v1600, 4
      %v1602 = vmax.f32 %v1600, %v1601
      %v1603 = vrot.slane %v1602, 2
      %v1604 = vmax.f32 %v1602, %v1603
      %v1605 = vrot.slane %v1604, 1
      %v1606 = vmax.f32 %v1604, %v1605
      %vm1607 = vcmp.le.f32.partialorder %v1592, 0.01
      %vm1608 = vcmp.le.f32.partialorder %v1599, 0.01
      %vm1609 = vcmp.le.f32.partialorder %v1606, 0.01
      %v1610 = vsel %vm1607, 1, 0
      %v1611 = vsel %vm1608, 1, 0
      %v1612 = vsel %vm1609, 1, 0
      %v1613 = vcvt.s32.f32 %v1610
      %v1614 = vcvt.s32.f32 %v1611
      %v1615 = vcvt.s32.f32 %v1612
      %v1616 = vadd.f32 %v1573, 1e-08
      %v1617 = vadd.f32 %v1576, 1e-08
      %v1618 = vadd.f32 %v1579, 1e-08
      %v1619 = vrcp.pop %v1616
      %v1620 = vrcp.pop %v1617
      %v1621 = vrcp.pop %v1618
      %v1622 = vmul.f32 %v979, %v1619
      %v1623 = vmul.f32 %v980, %v1620
      %v1624 = vmul.f32 %v981, %v1621
      %1626 = vset.pattern.permute.xlu0 0
      %1627 = vperm.xlu0 %1626, %v1622
      %v1628 = vpop.permute.xlu0 %1627
      %1631 = vset.pattern.permute.xlu0 0
      %1632 = vperm.xlu0 %1631, %v1623
      %v1633 = vpop.permute.xlu0 %1632
      %1636 = vset.pattern.permute.xlu0 0
      %1637 = vperm.xlu0 %1636, %v1624
      %v1638 = vpop.permute.xlu0 %1637
      %v1640 = vmul.f32 %v1568, %v1628
      %v1641 = vmul.f32 %v1569, %v1633
      %v1642 = vmul.f32 %v1570, %v1638
      %v1643 = vsel %vm581, %v1640, 0.0
      %v1644 = vrot.slane %v1643, 4
      %v1645 = vadd.f32 %v1643, %v1644
      %v1646 = vrot.slane %v1645, 2
      %v1647 = vadd.f32 %v1645, %v1646
      %v1648 = vrot.slane %v1647, 1
      %v1649 = vadd.f32 %v1647, %v1648
      %v1650 = vsel %vm581, %v1641, 0.0
      %v1651 = vrot.slane %v1650, 4
      %v1652 = vadd.f32 %v1650, %v1651
      %v1653 = vrot.slane %v1652, 2
      %v1654 = vadd.f32 %v1652, %v1653
      %v1655 = vrot.slane %v1654, 1
      %v1656 = vadd.f32 %v1654, %v1655
      %v1657 = vsel %vm581, %v1642, 0.0
      %v1658 = vrot.slane %v1657, 4
      %v1659 = vadd.f32 %v1657, %v1658
      %v1660 = vrot.slane %v1659, 2
      %v1661 = vadd.f32 %v1659, %v1660
      %v1662 = vrot.slane %v1661, 1
      %v1663 = vadd.f32 %v1661, %v1662
      %v1664 = vsub.f32 %v1649, %v982
      %v1665 = vsub.f32 %v1656, %v983
      %v1666 = vsub.f32 %v1663, %v984
      %v1667 = vand.u32 2147483647, %v1664
      %v1668 = vand.u32 2147483647, %v1665
      %v1669 = vand.u32 2147483647, %v1666
      %v1670 = vsel %vm1165, %v1667, -inf
      %1671 = vmax.xlane.f32.xlu0 %v1670
      %v1672 = vpop.xlane.xlu0 %1671
      %v1673 = vsel %vm1165, %v1668, -inf
      %1674 = vmax.xlane.f32.xlu0 %v1673
      %v1675 = vpop.xlane.xlu0 %1674
      %v1676 = vsel %vm1165, %v1669, -inf
      %1677 = vmax.xlane.f32.xlu0 %v1676
      %v1678 = vpop.xlane.xlu0 %1677
      %vm1679 = vcmp.le.f32.partialorder %v1672, 0.01
      %vm1680 = vcmp.le.f32.partialorder %v1675, 0.01
      %vm1681 = vcmp.le.f32.partialorder %v1678, 0.01
      %v1682 = vsel %vm1679, 1, 0
      %v1683 = vsel %vm1680, 1, 0
      %v1684 = vsel %vm1681, 1, 0
      %v1685 = vcvt.s32.f32 %v1682
      %v1686 = vcvt.s32.f32 %v1683
      %v1687 = vcvt.s32.f32 %v1684
      %1689 = vset.pattern.permute.xlu0 0
      %1690 = vperm.xlu0 %1689, %v1613
      %v1691 = vpop.permute.xlu0 %1690
      %1694 = vset.pattern.permute.xlu0 0
      %1695 = vperm.xlu0 %1694, %v1614
      %v1696 = vpop.permute.xlu0 %1695
      %1699 = vset.pattern.permute.xlu0 0
      %1700 = vperm.xlu0 %1699, %v1615
      %v1701 = vpop.permute.xlu0 %1700
      %v1703 = vmul.f32 %v1691, %v1568
      %v1704 = vmul.f32 %v1696, %v1569
      %v1705 = vmul.f32 %v1701, %v1570
      %v1706 = vsub.f32 1.0, %v1613
      %v1707 = vsub.f32 1.0, %v1614
      %v1708 = vsub.f32 1.0, %v1615
      %1710 = vset.pattern.permute.xlu0 0
      %1711 = vperm.xlu0 %1710, %v1706
      %v1712 = vpop.permute.xlu0 %1711
      %1715 = vset.pattern.permute.xlu0 0
      %1716 = vperm.xlu0 %1715, %v1707
      %v1717 = vpop.permute.xlu0 %1716
      %1720 = vset.pattern.permute.xlu0 0
      %1721 = vperm.xlu0 %1720, %v1708
      %v1722 = vpop.permute.xlu0 %1721
      %v1724 = vmul.f32 %v1712, %v1640
      %v1725 = vmul.f32 %v1717, %v1641
      %v1726 = vmul.f32 %v1722, %v1642
      %v1727 = vadd.f32 %v1703, %v1724
      %v1728 = vadd.f32 %v1704, %v1725
      %v1729 = vadd.f32 %v1705, %v1726
      %v1730 = vmax.f32 %v1613, %v1685
      %v1731 = vmax.f32 %v1614, %v1686
      %v1732 = vmax.f32 %v1615, %v1687
      %s1734 = vtos %v1517
      %v1735 = vstv %s1734
      %s1738 = vtos %v1518
      %v1739 = vstv %s1738
      %s1742 = vtos %v1519
      %v1743 = vstv %s1742
      %v1745 = vmul.f32 %v1735, %v1514
      %v1746 = vmul.f32 %v1739, %v1515
      %v1747 = vmul.f32 %v1743, %v1516
      %v1748 = vsub.f32 1.0, %v1517
      %v1749 = vsub.f32 1.0, %v1518
      %v1750 = vsub.f32 1.0, %v1519
      %s1752 = vtos %v1748
      %v1753 = vstv %s1752
      %s1756 = vtos %v1749
      %v1757 = vstv %s1756
      %s1760 = vtos %v1750
      %v1761 = vstv %s1760
      %v1763 = vmul.f32 %v1753, %v1727
      %v1764 = vmul.f32 %v1757, %v1728
      %v1765 = vmul.f32 %v1761, %v1729
      %v1766 = vadd.f32 %v1745, %v1763
      %v1767 = vadd.f32 %v1746, %v1764
      %v1768 = vadd.f32 %v1747, %v1765
      %v1769 = vmax.f32 %v1517, %v1730
      %v1770 = vmax.f32 %v1518, %v1731
      %v1771 = vmax.f32 %v1519, %v1732
      %v1772 = vsel %vm581, %v1766, 0.0
      %v1773 = vrot.slane %v1772, 4
      %v1774 = vadd.f32 %v1772, %v1773
      %v1775 = vrot.slane %v1774, 2
      %v1776 = vadd.f32 %v1774, %v1775
      %v1777 = vrot.slane %v1776, 1
      %v1778 = vadd.f32 %v1776, %v1777
      %v1779 = vsel %vm581, %v1767, 0.0
      %v1780 = vrot.slane %v1779, 4
      %v1781 = vadd.f32 %v1779, %v1780
      %v1782 = vrot.slane %v1781, 2
      %v1783 = vadd.f32 %v1781, %v1782
      %v1784 = vrot.slane %v1783, 1
      %v1785 = vadd.f32 %v1783, %v1784
      %v1786 = vsel %vm581, %v1768, 0.0
      %v1787 = vrot.slane %v1786, 4
      %v1788 = vadd.f32 %v1786, %v1787
      %v1789 = vrot.slane %v1788, 2
      %v1790 = vadd.f32 %v1788, %v1789
      %v1791 = vrot.slane %v1790, 1
      %v1792 = vadd.f32 %v1790, %v1791
      %v1793 = vadd.f32 %v1778, 1e-08
      %v1794 = vadd.f32 %v1785, 1e-08
      %v1795 = vadd.f32 %v1792, 1e-08
      %v1796 = vrcp.pop %v1793
      %v1797 = vrcp.pop %v1794
      %v1798 = vrcp.pop %v1795
      %v1799 = vmul.f32 %v982, %v1796
      %v1800 = vmul.f32 %v983, %v1797
      %v1801 = vmul.f32 %v984, %v1798
      %v1805 = vlaneseq
      %v1806 = vshrl.u32 %v1805, 7
      %v1807 = vsub.s32 0, %v1806
      %v1808 = vrot.slane %v1799, %v1807
      %v1809 = vlaneseq
      %v1810 = vshrl.u32 %v1809, 7
      %v1811 = vsub.s32 0, %v1810
      %v1812 = vrot.slane %v1800, %v1811
      %v1813 = vlaneseq
      %v1814 = vshrl.u32 %v1813, 7
      %v1815 = vsub.s32 0, %v1814
      %v1816 = vrot.slane %v1801, %v1815
      %v1820 = vmul.f32 %v1766, %v1808
      %v1821 = vmul.f32 %v1767, %v1812
      %v1822 = vmul.f32 %v1768, %v1816
      %v1823 = vsel %vm581, %v1820, 0.0
      %1824 = vadd.xlane.f32.xlu0 %v1823
      %v1825 = vpop.xlane.xlu0 %1824
      %v1826 = vsel %vm581, %v1821, 0.0
      %1827 = vadd.xlane.f32.xlu0 %v1826
      %v1828 = vpop.xlane.xlu0 %1827
      %v1829 = vsel %vm581, %v1822, 0.0
      %1830 = vadd.xlane.f32.xlu0 %v1829
      %v1831 = vpop.xlane.xlu0 %1830
      %v1832 = vsub.f32 %v1825, %v979
      %v1833 = vsub.f32 %v1828, %v980
      %v1834 = vsub.f32 %v1831, %v981
      %v1835 = vand.u32 2147483647, %v1832
      %v1836 = vand.u32 2147483647, %v1833
      %v1837 = vand.u32 2147483647, %v1834
      %v1838 = vsel %vm1080, %v1835, -inf
      %v1839 = vrot.slane %v1838, 4
      %v1840 = vmax.f32 %v1838, %v1839
      %v1841 = vrot.slane %v1840, 2
      %v1842 = vmax.f32 %v1840, %v1841
      %v1843 = vrot.slane %v1842, 1
      %v1844 = vmax.f32 %v1842, %v1843
      %v1845 = vsel %vm1080, %v1836, -inf
      %v1846 = vrot.slane %v1845, 4
      %v1847 = vmax.f32 %v1845, %v1846
      %v1848 = vrot.slane %v1847, 2
      %v1849 = vmax.f32 %v1847, %v1848
      %v1850 = vrot.slane %v1849, 1
      %v1851 = vmax.f32 %v1849, %v1850
      %v1852 = vsel %vm1080, %v1837, -inf
      %v1853 = vrot.slane %v1852, 4
      %v1854 = vmax.f32 %v1852, %v1853
      %v1855 = vrot.slane %v1854, 2
      %v1856 = vmax.f32 %v1854, %v1855
      %v1857 = vrot.slane %v1856, 1
      %v1858 = vmax.f32 %v1856, %v1857
      %vm1859 = vcmp.le.f32.partialorder %v1844, 0.01
      %vm1860 = vcmp.le.f32.partialorder %v1851, 0.01
      %vm1861 = vcmp.le.f32.partialorder %v1858, 0.01
      %v1862 = vsel %vm1859, 1, 0
      %v1863 = vsel %vm1860, 1, 0
      %v1864 = vsel %vm1861, 1, 0
      %v1865 = vcvt.s32.f32 %v1862
      %v1866 = vcvt.s32.f32 %v1863
      %v1867 = vcvt.s32.f32 %v1864
      %v1868 = vadd.f32 %v1825, 1e-08
      %v1869 = vadd.f32 %v1828, 1e-08
      %v1870 = vadd.f32 %v1831, 1e-08
      %v1871 = vrcp.pop %v1868
      %v1872 = vrcp.pop %v1869
      %v1873 = vrcp.pop %v1870
      %v1874 = vmul.f32 %v979, %v1871
      %v1875 = vmul.f32 %v980, %v1872
      %v1876 = vmul.f32 %v981, %v1873
      %1878 = vset.pattern.permute.xlu0 0
      %1879 = vperm.xlu0 %1878, %v1874
      %v1880 = vpop.permute.xlu0 %1879
      %1883 = vset.pattern.permute.xlu0 0
      %1884 = vperm.xlu0 %1883, %v1875
      %v1885 = vpop.permute.xlu0 %1884
      %1888 = vset.pattern.permute.xlu0 0
      %1889 = vperm.xlu0 %1888, %v1876
      %v1890 = vpop.permute.xlu0 %1889
      %v1892 = vmul.f32 %v1820, %v1880
      %v1893 = vmul.f32 %v1821, %v1885
      %v1894 = vmul.f32 %v1822, %v1890
      %v1895 = vsel %vm581, %v1892, 0.0
      %v1896 = vrot.slane %v1895, 4
      %v1897 = vadd.f32 %v1895, %v1896
      %v1898 = vrot.slane %v1897, 2
      %v1899 = vadd.f32 %v1897, %v1898
      %v1900 = vrot.slane %v1899, 1
      %v1901 = vadd.f32 %v1899, %v1900
      %v1902 = vsel %vm581, %v1893, 0.0
      %v1903 = vrot.slane %v1902, 4
      %v1904 = vadd.f32 %v1902, %v1903
      %v1905 = vrot.slane %v1904, 2
      %v1906 = vadd.f32 %v1904, %v1905
      %v1907 = vrot.slane %v1906, 1
      %v1908 = vadd.f32 %v1906, %v1907
      %v1909 = vsel %vm581, %v1894, 0.0
      %v1910 = vrot.slane %v1909, 4
      %v1911 = vadd.f32 %v1909, %v1910
      %v1912 = vrot.slane %v1911, 2
      %v1913 = vadd.f32 %v1911, %v1912
      %v1914 = vrot.slane %v1913, 1
      %v1915 = vadd.f32 %v1913, %v1914
      %v1916 = vsub.f32 %v1901, %v982
      %v1917 = vsub.f32 %v1908, %v983
      %v1918 = vsub.f32 %v1915, %v984
      %v1919 = vand.u32 2147483647, %v1916
      %v1920 = vand.u32 2147483647, %v1917
      %v1921 = vand.u32 2147483647, %v1918
      %v1922 = vsel %vm1165, %v1919, -inf
      %1923 = vmax.xlane.f32.xlu0 %v1922
      %v1924 = vpop.xlane.xlu0 %1923
      %v1925 = vsel %vm1165, %v1920, -inf
      %1926 = vmax.xlane.f32.xlu0 %v1925
      %v1927 = vpop.xlane.xlu0 %1926
      %v1928 = vsel %vm1165, %v1921, -inf
      %1929 = vmax.xlane.f32.xlu0 %v1928
      %v1930 = vpop.xlane.xlu0 %1929
      %vm1931 = vcmp.le.f32.partialorder %v1924, 0.01
      %vm1932 = vcmp.le.f32.partialorder %v1927, 0.01
      %vm1933 = vcmp.le.f32.partialorder %v1930, 0.01
      %v1934 = vsel %vm1931, 1, 0
      %v1935 = vsel %vm1932, 1, 0
      %v1936 = vsel %vm1933, 1, 0
      %v1937 = vcvt.s32.f32 %v1934
      %v1938 = vcvt.s32.f32 %v1935
      %v1939 = vcvt.s32.f32 %v1936
      %1941 = vset.pattern.permute.xlu0 0
      %1942 = vperm.xlu0 %1941, %v1865
      %v1943 = vpop.permute.xlu0 %1942
      %1946 = vset.pattern.permute.xlu0 0
      %1947 = vperm.xlu0 %1946, %v1866
      %v1948 = vpop.permute.xlu0 %1947
      %1951 = vset.pattern.permute.xlu0 0
      %1952 = vperm.xlu0 %1951, %v1867
      %v1953 = vpop.permute.xlu0 %1952
      %v1955 = vmul.f32 %v1943, %v1820
      %v1956 = vmul.f32 %v1948, %v1821
      %v1957 = vmul.f32 %v1953, %v1822
      %v1958 = vsub.f32 1.0, %v1865
      %v1959 = vsub.f32 1.0, %v1866
      %v1960 = vsub.f32 1.0, %v1867
      %1962 = vset.pattern.permute.xlu0 0
      %1963 = vperm.xlu0 %1962, %v1958
      %v1964 = vpop.permute.xlu0 %1963
      %1967 = vset.pattern.permute.xlu0 0
      %1968 = vperm.xlu0 %1967, %v1959
      %v1969 = vpop.permute.xlu0 %1968
      %1972 = vset.pattern.permute.xlu0 0
      %1973 = vperm.xlu0 %1972, %v1960
      %v1974 = vpop.permute.xlu0 %1973
      %v1976 = vmul.f32 %v1964, %v1892
      %v1977 = vmul.f32 %v1969, %v1893
      %v1978 = vmul.f32 %v1974, %v1894
      %v1979 = vadd.f32 %v1955, %v1976
      %v1980 = vadd.f32 %v1956, %v1977
      %v1981 = vadd.f32 %v1957, %v1978
      %v1982 = vmax.f32 %v1865, %v1937
      %v1983 = vmax.f32 %v1866, %v1938
      %v1984 = vmax.f32 %v1867, %v1939
      %s1986 = vtos %v1769
      %v1987 = vstv %s1986
      %s1990 = vtos %v1770
      %v1991 = vstv %s1990
      %s1994 = vtos %v1771
      %v1995 = vstv %s1994
      %v1997 = vmul.f32 %v1987, %v1766
      %v1998 = vmul.f32 %v1991, %v1767
      %v1999 = vmul.f32 %v1995, %v1768
      %v2000 = vsub.f32 1.0, %v1769
      %v2001 = vsub.f32 1.0, %v1770
      %v2002 = vsub.f32 1.0, %v1771
      %s2004 = vtos %v2000
      %v2005 = vstv %s2004
      %s2008 = vtos %v2001
      %v2009 = vstv %s2008
      %s2012 = vtos %v2002
      %v2013 = vstv %s2012
      %v2015 = vmul.f32 %v2005, %v1979
      %v2016 = vmul.f32 %v2009, %v1980
      %v2017 = vmul.f32 %v2013, %v1981
      %v2018 = vadd.f32 %v1997, %v2015
      %v2019 = vadd.f32 %v1998, %v2016
      %v2020 = vadd.f32 %v1999, %v2017
      %v2021 = vmax.f32 %v1769, %v1982
      %v2022 = vmax.f32 %v1770, %v1983
      %v2023 = vmax.f32 %v1771, %v1984
      %v2024 = vsel %vm581, %v2018, 0.0
      %v2025 = vrot.slane %v2024, 4
      %v2026 = vadd.f32 %v2024, %v2025
      %v2027 = vrot.slane %v2026, 2
      %v2028 = vadd.f32 %v2026, %v2027
      %v2029 = vrot.slane %v2028, 1
      %v2030 = vadd.f32 %v2028, %v2029
      %v2031 = vsel %vm581, %v2019, 0.0
      %v2032 = vrot.slane %v2031, 4
      %v2033 = vadd.f32 %v2031, %v2032
      %v2034 = vrot.slane %v2033, 2
      %v2035 = vadd.f32 %v2033, %v2034
      %v2036 = vrot.slane %v2035, 1
      %v2037 = vadd.f32 %v2035, %v2036
      %v2038 = vsel %vm581, %v2020, 0.0
      %v2039 = vrot.slane %v2038, 4
      %v2040 = vadd.f32 %v2038, %v2039
      %v2041 = vrot.slane %v2040, 2
      %v2042 = vadd.f32 %v2040, %v2041
      %v2043 = vrot.slane %v2042, 1
      %v2044 = vadd.f32 %v2042, %v2043
      %v2045 = vadd.f32 %v2030, 1e-08
      %v2046 = vadd.f32 %v2037, 1e-08
      %v2047 = vadd.f32 %v2044, 1e-08
      %v2048 = vrcp.pop %v2045
      %v2049 = vrcp.pop %v2046
      %v2050 = vrcp.pop %v2047
      %v2051 = vmul.f32 %v982, %v2048
      %v2052 = vmul.f32 %v983, %v2049
      %v2053 = vmul.f32 %v984, %v2050
      %v2057 = vlaneseq
      %v2058 = vshrl.u32 %v2057, 7
      %v2059 = vsub.s32 0, %v2058
      %v2060 = vrot.slane %v2051, %v2059
      %v2061 = vlaneseq
      %v2062 = vshrl.u32 %v2061, 7
      %v2063 = vsub.s32 0, %v2062
      %v2064 = vrot.slane %v2052, %v2063
      %v2065 = vlaneseq
      %v2066 = vshrl.u32 %v2065, 7
      %v2067 = vsub.s32 0, %v2066
      %v2068 = vrot.slane %v2053, %v2067
      %v2072 = vmul.f32 %v2018, %v2060
      %v2073 = vmul.f32 %v2019, %v2064
      %v2074 = vmul.f32 %v2020, %v2068
      %v2075 = vsel %vm581, %v2072, 0.0
      %2076 = vadd.xlane.f32.xlu0 %v2075
      %v2077 = vpop.xlane.xlu0 %2076
      %v2078 = vsel %vm581, %v2073, 0.0
      %2079 = vadd.xlane.f32.xlu0 %v2078
      %v2080 = vpop.xlane.xlu0 %2079
      %v2081 = vsel %vm581, %v2074, 0.0
      %2082 = vadd.xlane.f32.xlu0 %v2081
      %v2083 = vpop.xlane.xlu0 %2082
      %v2084 = vsub.f32 %v2077, %v979
      %v2085 = vsub.f32 %v2080, %v980
      %v2086 = vsub.f32 %v2083, %v981
      %v2087 = vand.u32 2147483647, %v2084
      %v2088 = vand.u32 2147483647, %v2085
      %v2089 = vand.u32 2147483647, %v2086
      %v2090 = vsel %vm1080, %v2087, -inf
      %v2091 = vrot.slane %v2090, 4
      %v2092 = vmax.f32 %v2090, %v2091
      %v2093 = vrot.slane %v2092, 2
      %v2094 = vmax.f32 %v2092, %v2093
      %v2095 = vrot.slane %v2094, 1
      %v2096 = vmax.f32 %v2094, %v2095
      %v2097 = vsel %vm1080, %v2088, -inf
      %v2098 = vrot.slane %v2097, 4
      %v2099 = vmax.f32 %v2097, %v2098
      %v2100 = vrot.slane %v2099, 2
      %v2101 = vmax.f32 %v2099, %v2100
      %v2102 = vrot.slane %v2101, 1
      %v2103 = vmax.f32 %v2101, %v2102
      %v2104 = vsel %vm1080, %v2089, -inf
      %v2105 = vrot.slane %v2104, 4
      %v2106 = vmax.f32 %v2104, %v2105
      %v2107 = vrot.slane %v2106, 2
      %v2108 = vmax.f32 %v2106, %v2107
      %v2109 = vrot.slane %v2108, 1
      %v2110 = vmax.f32 %v2108, %v2109
      %vm2111 = vcmp.le.f32.partialorder %v2096, 0.01
      %vm2112 = vcmp.le.f32.partialorder %v2103, 0.01
      %vm2113 = vcmp.le.f32.partialorder %v2110, 0.01
      %v2114 = vsel %vm2111, 1, 0
      %v2115 = vsel %vm2112, 1, 0
      %v2116 = vsel %vm2113, 1, 0
      %v2117 = vcvt.s32.f32 %v2114
      %v2118 = vcvt.s32.f32 %v2115
      %v2119 = vcvt.s32.f32 %v2116
      %v2120 = vadd.f32 %v2077, 1e-08
      %v2121 = vadd.f32 %v2080, 1e-08
      %v2122 = vadd.f32 %v2083, 1e-08
      %v2123 = vrcp.pop %v2120
      %v2124 = vrcp.pop %v2121
      %v2125 = vrcp.pop %v2122
      %v2126 = vmul.f32 %v979, %v2123
      %v2127 = vmul.f32 %v980, %v2124
      %v2128 = vmul.f32 %v981, %v2125
      %2130 = vset.pattern.permute.xlu0 0
      %2131 = vperm.xlu0 %2130, %v2126
      %v2132 = vpop.permute.xlu0 %2131
      %2135 = vset.pattern.permute.xlu0 0
      %2136 = vperm.xlu0 %2135, %v2127
      %v2137 = vpop.permute.xlu0 %2136
      %2140 = vset.pattern.permute.xlu0 0
      %2141 = vperm.xlu0 %2140, %v2128
      %v2142 = vpop.permute.xlu0 %2141
      %v2144 = vmul.f32 %v2072, %v2132
      %v2145 = vmul.f32 %v2073, %v2137
      %v2146 = vmul.f32 %v2074, %v2142
      %v2147 = vsel %vm581, %v2144, 0.0
      %v2148 = vrot.slane %v2147, 4
      %v2149 = vadd.f32 %v2147, %v2148
      %v2150 = vrot.slane %v2149, 2
      %v2151 = vadd.f32 %v2149, %v2150
      %v2152 = vrot.slane %v2151, 1
      %v2153 = vadd.f32 %v2151, %v2152
      %v2154 = vsel %vm581, %v2145, 0.0
      %v2155 = vrot.slane %v2154, 4
      %v2156 = vadd.f32 %v2154, %v2155
      %v2157 = vrot.slane %v2156, 2
      %v2158 = vadd.f32 %v2156, %v2157
      %v2159 = vrot.slane %v2158, 1
      %v2160 = vadd.f32 %v2158, %v2159
      %v2161 = vsel %vm581, %v2146, 0.0
      %v2162 = vrot.slane %v2161, 4
      %v2163 = vadd.f32 %v2161, %v2162
      %v2164 = vrot.slane %v2163, 2
      %v2165 = vadd.f32 %v2163, %v2164
      %v2166 = vrot.slane %v2165, 1
      %v2167 = vadd.f32 %v2165, %v2166
      %v2168 = vsub.f32 %v2153, %v982
      %v2169 = vsub.f32 %v2160, %v983
      %v2170 = vsub.f32 %v2167, %v984
      %v2171 = vand.u32 2147483647, %v2168
      %v2172 = vand.u32 2147483647, %v2169
      %v2173 = vand.u32 2147483647, %v2170
      %v2174 = vsel %vm1165, %v2171, -inf
      %2175 = vmax.xlane.f32.xlu0 %v2174
      %v2176 = vpop.xlane.xlu0 %2175
      %v2177 = vsel %vm1165, %v2172, -inf
      %2178 = vmax.xlane.f32.xlu0 %v2177
      %v2179 = vpop.xlane.xlu0 %2178
      %v2180 = vsel %vm1165, %v2173, -inf
      %2181 = vmax.xlane.f32.xlu0 %v2180
      %v2182 = vpop.xlane.xlu0 %2181
      %vm2183 = vcmp.le.f32.partialorder %v2176, 0.01
      %vm2184 = vcmp.le.f32.partialorder %v2179, 0.01
      %vm2185 = vcmp.le.f32.partialorder %v2182, 0.01
      %v2186 = vsel %vm2183, 1, 0
      %v2187 = vsel %vm2184, 1, 0
      %v2188 = vsel %vm2185, 1, 0
      %v2189 = vcvt.s32.f32 %v2186
      %v2190 = vcvt.s32.f32 %v2187
      %v2191 = vcvt.s32.f32 %v2188
      %2193 = vset.pattern.permute.xlu0 0
      %2194 = vperm.xlu0 %2193, %v2117
      %v2195 = vpop.permute.xlu0 %2194
      %2198 = vset.pattern.permute.xlu0 0
      %2199 = vperm.xlu0 %2198, %v2118
      %v2200 = vpop.permute.xlu0 %2199
      %2203 = vset.pattern.permute.xlu0 0
      %2204 = vperm.xlu0 %2203, %v2119
      %v2205 = vpop.permute.xlu0 %2204
      %v2207 = vmul.f32 %v2195, %v2072
      %v2208 = vmul.f32 %v2200, %v2073
      %v2209 = vmul.f32 %v2205, %v2074
      %v2210 = vsub.f32 1.0, %v2117
      %v2211 = vsub.f32 1.0, %v2118
      %v2212 = vsub.f32 1.0, %v2119
      %2214 = vset.pattern.permute.xlu0 0
      %2215 = vperm.xlu0 %2214, %v2210
      %v2216 = vpop.permute.xlu0 %2215
      %2219 = vset.pattern.permute.xlu0 0
      %2220 = vperm.xlu0 %2219, %v2211
      %v2221 = vpop.permute.xlu0 %2220
      %2224 = vset.pattern.permute.xlu0 0
      %2225 = vperm.xlu0 %2224, %v2212
      %v2226 = vpop.permute.xlu0 %2225
      %v2228 = vmul.f32 %v2216, %v2144
      %v2229 = vmul.f32 %v2221, %v2145
      %v2230 = vmul.f32 %v2226, %v2146
      %v2231 = vadd.f32 %v2207, %v2228
      %v2232 = vadd.f32 %v2208, %v2229
      %v2233 = vadd.f32 %v2209, %v2230
      %v2234 = vmax.f32 %v2117, %v2189
      %v2235 = vmax.f32 %v2118, %v2190
      %v2236 = vmax.f32 %v2119, %v2191
      %s2238 = vtos %v2021
      %v2239 = vstv %s2238
      %s2242 = vtos %v2022
      %v2243 = vstv %s2242
      %s2246 = vtos %v2023
      %v2247 = vstv %s2246
      %v2249 = vmul.f32 %v2239, %v2018
      %v2250 = vmul.f32 %v2243, %v2019
      %v2251 = vmul.f32 %v2247, %v2020
      %v2252 = vsub.f32 1.0, %v2021
      %v2253 = vsub.f32 1.0, %v2022
      %v2254 = vsub.f32 1.0, %v2023
      %s2256 = vtos %v2252
      %v2257 = vstv %s2256
      %s2260 = vtos %v2253
      %v2261 = vstv %s2260
      %s2264 = vtos %v2254
      %v2265 = vstv %s2264
      %v2267 = vmul.f32 %v2257, %v2231
      %v2268 = vmul.f32 %v2261, %v2232
      %v2269 = vmul.f32 %v2265, %v2233
      %v2270 = vadd.f32 %v2249, %v2267
      %v2271 = vadd.f32 %v2250, %v2268
      %v2272 = vadd.f32 %v2251, %v2269
      %v2273 = vmax.f32 %v2021, %v2234
      %v2274 = vmax.f32 %v2022, %v2235
      %v2275 = vmax.f32 %v2023, %v2236
      %s2276 = sadd.s32 %s992, 5
    $region74: #{tpu_custom_call.1} parent=1 // loop_footer
      _
    $region75: #{tpu_custom_call.1} parent=1 // loop_footer_branch
      %985 = sbr.rel target = $region71
    $region76: #{tpu_custom_call.1} parent=1 // loop_exit
      _
    %2277 = vst.msk [vmem:[#allocation5] sm:$0xff] %vm581, %v986
    %2278 = vst.msk [vmem:[#allocation5 + $0x8] sm:$0xff] %vm581, %v987
    %2279 = vst.msk [vmem:[#allocation5 + $0x10] sm:$0xff] %vm581, %v988
    // Predicated region
    $region77: #{tpu_custom_call.1} parent=1 // pred_check
      _
    $region78: #{tpu_custom_call.1} parent=1 // pred_check_branch
      %2281 = sbr.rel (0) target = $region80
    $region79: #{tpu_custom_call.1} parent=1 // pred_region
      %s2283 = ssub.s32 384, 384
      %2284 = vsyncadd [#allocation4], %s2283
      %s2285 = sshll.u32 [#allocation5], 4
      %s2286 = int_to_ptr.vmem [resolvable:$true] %s2285
      %2291 = dma.vmem_to_hbm [thread:$0]  %s2286, 384, %s16, [#allocation4], 128, 128, 8
    $region80: #{tpu_custom_call.1} parent=1 // pred_fallthru
      _
    // Predicated region
    $region81: #{tpu_custom_call.1} parent=1 // pred_check
      _
    $region82: #{tpu_custom_call.1} parent=1 // pred_check_branch
      %2293 = sbr.rel (0) target = $region84
    $region83: #{tpu_custom_call.1} parent=1 // pred_region
      %2294 = dma.done [#allocation4], 384
    $region84: #{tpu_custom_call.1} parent=1 // pred_fallthru
      _
    %2295 = vsyncpa [#allocation3], 1
    %2296 = vsyncpa [#allocation4], 1

</llo_original>
